<compile_context>
chip_gen: v7x
topology: tpu7x:2x2x1
jax: 0.10.0
libtpu: 0.0.40
codegen_flags: <defaults>
</compile_context>

<pallas_src>
import jax
import jax.numpy as jnp
import jax.scipy.linalg as jsl
from jax.experimental import pallas as pl
from jax.experimental.pallas import tpu as pltpu

D_DIM = 16          # small config (original uses 64); N = D_DIM**2 = 256
M_MEAS = 128        # number of measurements (rows of R / length of d)
NOISE_RATE = 0.125
NORM = 1.2


# ----------------------------------------------------------------------------
# Fused Pallas kernel:
#   f_cov = sigma_l^2 * exp(-|x_i - x_j|^2 / (2 l_l^2))          (N, N)
#   A     = (R^T R) / sigma_d                                     (N, N)
#   rtd   = (R^T d) / sigma_d   (lane-dense, row 0 of (8, N))     (8, N)
# All operands are VMEM-resident (well under VMEM on v5e/v6e/v7x at N=256).
# ----------------------------------------------------------------------------
def _fused_gp_body(params_ref, xr_col_ref, xz_col_ref, xr_row_ref, xz_row_ref,
                   r_ref, rt_ref, d_pad_ref,
                   f_cov_ref, a_ref, rtd_ref):
    sigma2 = params_ref[0]        # sigma_l ** 2
    neg_inv_2l2 = params_ref[1]   # -1 / (2 * l_l ** 2)
    inv_sigma_d = params_ref[2]   # 1 / sigma_d

    # RBF covariance via (N,1)-(1,N) broadcast; exp goes to the EUP slot,
    # the divide has been folded into neg_inv_2l2 (single multiply).
    dr = xr_col_ref[...] - xr_row_ref[...]
    dz = xz_col_ref[...] - xz_row_ref[...]
    dsq = dr * dr + dz * dz
    f_cov_ref[...] = sigma2 * jnp.exp(dsq * neg_inv_2l2)

    # A = (R^T R) / sigma_d : one standard MXU matmul, no in-kernel transpose
    # (R^T is passed in pre-transposed).
    r = r_ref[...]                                           # (M, N)
    a_ref[...] = inv_sigma_d * jnp.dot(
        rt_ref[...], r, preferred_element_type=jnp.float32)  # (N, N)

    # rtd = (R^T d) / sigma_d as lane-dense rows: (8, M) @ (M, N) -> (8, N),
    # measurement vector in row 0 (avoids a (K,1) lane-sparse matvec).
    rtd_ref[...] = inv_sigma_d * jnp.dot(
        d_pad_ref[...], r, preferred_element_type=jnp.float32)


def fused_gp_precompute(x, R, Rt, d, sigma_l, l_l, sigma_d):
    """x: (N,2), R: (M,N), Rt: (N,M), d: (M,) -> (f_cov (N,N), A (N,N), rtd (N,))."""
    N = x.shape[0]
    M = R.shape[0]

    xr_col = x[:, 0:1]                      # (N, 1)
    xz_col = x[:, 1:2]                      # (N, 1)
    xr_row = x[:, 0].reshape(1, N)          # (1, N)
    xz_row = x[:, 1].reshape(1, N)          # (1, N)
    d_pad = jnp.zeros((8, M), jnp.float32).at[0].set(d.astype(jnp.float32))

    params = jnp.stack([
        sigma_l * sigma_l,
        -0.5 / (l_l * l_l),
        1.0 / sigma_d,
    ]).astype(jnp.float32)

    vmem = pl.BlockSpec(memory_space=pltpu.MemorySpace.VMEM)
    smem = pl.BlockSpec(memory_space=pltpu.MemorySpace.SMEM)

    f_cov, a_mat, rtd_pad = pl.pallas_call(
        _fused_gp_body,
        out_shape=(
            jax.ShapeDtypeStruct((N, N), jnp.float32),
            jax.ShapeDtypeStruct((N, N), jnp.float32),
            jax.ShapeDtypeStruct((8, N), jnp.float32),
        ),
        in_specs=[smem, vmem, vmem, vmem, vmem, vmem, vmem, vmem],
        out_specs=(vmem, vmem, vmem),
    )(params, xr_col, xz_col, xr_row, xz_row, R, Rt, d_pad)

    return f_cov, a_mat, rtd_pad[0]


# ----------------------------------------------------------------------------
# NNGPT module (SE-kernel forward path)
# ----------------------------------------------------------------------------
class NNGPT:
    def __init__(self, R, d, circle, key):
        # scalar parameters (deterministic init, matching torch __init__)
        self.le = jnp.float32(1.0)
        self.lc = jnp.float32(1.0)
        self.lm = jnp.float32(1.0)
        self.l_l = jnp.float32(1.0)
        self.sigma_l = jnp.float32(1.0)
        self.sigma_f = jnp.float32(1.0)
        self.sigma_d = jnp.float32(200.0)

        self.R = R.astype(jnp.float32)                      # (M, N)
        self.Rt = jnp.transpose(self.R)                     # (N, M), built once
        self.d_raw = d.astype(jnp.float32)                  # (M,)
        noise_std = jnp.mean(jnp.abs(self.d_raw)) * NOISE_RATE
        noise = jax.random.normal(key, (d.shape[0],), jnp.float32) * noise_std
        self.d = self.d_raw + noise                         # (M,)

        Mm = self.d.shape[0]
        # d_cov is sigma_d * I  => its inverse is analytically I / sigma_d
        # (no LU inverse of a scaled identity).
        self.d_cov = self.sigma_d * jnp.eye(Mm, dtype=jnp.float32)
        self.d_cov_inv = jnp.eye(Mm, dtype=jnp.float32) / self.sigma_d

        # all_region grid coordinates -> self.x  (N, 2)
        ii, jj = jnp.meshgrid(jnp.arange(D_DIM), jnp.arange(D_DIM),
                              indexing="ij")
        self.x = jnp.stack(
            [(ii.reshape(-1) - D_DIM // 2) * NORM,
             (jj.reshape(-1) - D_DIM // 2) * NORM],
            axis=-1).astype(jnp.float32)                    # (N, 2)
        # known/unknown region bookkeeping is only used by the NS branch
        # (KERNEL='SE' here), so it is intentionally omitted.
        self._circle = circle  # kept for interface parity; unused in SE path

    def forward(self):
        N = self.x.shape[0]

        # Single fused Pallas kernel: f_cov, A = (R^T R)/sigma_d, rtd = (R^T d)/sigma_d
        f_cov, A, rtd = fused_gp_precompute(
            self.x, self.R, self.Rt, self.d, self.sigma_l, self.l_l, self.sigma_d)
        self.f_cov = f_cov
        self._A = A          # stashed for verification
        self._rtd = rtd

        eye_n = jnp.eye(N, dtype=jnp.float32)

        # SPD solves via Cholesky (cheaper and better conditioned than inv).
        cF = jsl.cho_factor(f_cov)
        self.f_cov_inv = jsl.cho_solve(cF, eye_n)

        B = A + self.f_cov_inv                   # == R^T d_cov_inv R + f_cov_inv
        cB = jsl.cho_factor(B)
        self.post_cov = jsl.cho_solve(cB, eye_n)
        # f_mu = post_cov @ (R^T d_cov_inv d), reusing the same factor.
        self.f_mu = jsl.cho_solve(cB, rtd)       # (N,)
        # inv(post_cov) is mathematically B itself — no redundant inverse.
        self.post_cov_inv = B

        # d_mu = R @ f_mu  (tiny matvec, plain JAX)
        self.d_mu = self.R @ self.f_mu           # (M,)
        return self.d_mu


# ----------------------------------------------------------------------------
# pure-JAX reference for verification (same solve chain, XLA-computed inputs)
# ----------------------------------------------------------------------------
def reference_forward(model):
    x = model.x
    dr = x[:, 0:1] - x[:, 0][None, :]
    dz = x[:, 1:2] - x[:, 1][None, :]
    dsq = dr * dr + dz * dz
    f_cov = model.sigma_l ** 2 * jnp.exp(-dsq / (2.0 * model.l_l ** 2))
    A = (model.R.T @ model.R) / model.sigma_d
    rtd = (model.R.T @ model.d) / model.sigma_d

    eye_n = jnp.eye(x.shape[0], dtype=jnp.float32)
    cF = jsl.cho_factor(f_cov)
    f_cov_inv = jsl.cho_solve(cF, eye_n)
    B = A + f_cov_inv
    cB = jsl.cho_factor(B)
    f_mu = jsl.cho_solve(cB, rtd)
    d_mu = model.R @ f_mu
    return f_cov, A, rtd, f_mu, d_mu


if __name__ == "__main__":
    key = jax.random.PRNGKey(0)
    k_r, k_d, k_noise = jax.random.split(key, 3)

    N = D_DIM * D_DIM
    # synthetic deterministic "forward operator" and measurements
    R = jax.random.normal(k_r, (M_MEAS, N), jnp.float32) / jnp.sqrt(N)
    d = jax.random.normal(k_d, (M_MEAS,), jnp.float32) * 2.0 + 1.0
    # synthetic stand-in for circle_{D_DIM}.npy (unused in the SE path)
    ii, jj = jnp.meshgrid(jnp.arange(D_DIM), jnp.arange(D_DIM), indexing="ij")
    r2 = ((ii - D_DIM // 2) ** 2 + (jj - D_DIM // 2) ** 2).astype(jnp.float32)
    circle = jnp.exp(-r2 / (2.0 * (D_DIM / 4.0) ** 2))

    model = NNGPT(R, d, circle, k_noise)
    d_mu = model.forward()
    jax.block_until_ready(d_mu)

    # verify the Pallas kernel outputs and the full chain against pure JAX
    f_cov_ref, A_ref, rtd_ref, f_mu_ref, d_mu_ref = reference_forward(model)
    assert jnp.allclose(model.f_cov, f_cov_ref, rtol=1e-4, atol=1e-5)
    assert jnp.allclose(model._A, A_ref, rtol=1e-2, atol=1e-5)
    assert jnp.allclose(model._rtd, rtd_ref, rtol=1e-2, atol=1e-4)
    assert jnp.allclose(model.f_mu, f_mu_ref, rtol=1e-2, atol=2e-3)
    assert jnp.allclose(model.d_mu, d_mu_ref, rtol=1e-2, atol=2e-3)

    print("KERNEL_OK")
</pallas_src>

<mosaic_0001>
module attributes {stable_mosaic.version = 11 : i64} {
  func.func @_fused_gp_body(%arg0: memref<3xf32, #tpu.memory_space<smem>>, %arg1: memref<256x1xf32, #tpu.memory_space<vmem>>, %arg2: memref<256x1xf32, #tpu.memory_space<vmem>>, %arg3: memref<1x256xf32, #tpu.memory_space<vmem>>, %arg4: memref<1x256xf32, #tpu.memory_space<vmem>>, %arg5: memref<128x256xf32, #tpu.memory_space<vmem>>, %arg6: memref<256x128xf32, #tpu.memory_space<vmem>>, %arg7: memref<8x128xf32, #tpu.memory_space<vmem>>, %arg8: memref<256x256xf32, #tpu.memory_space<vmem>>, %arg9: memref<256x256xf32, #tpu.memory_space<vmem>>, %arg10: memref<8x256xf32, #tpu.memory_space<vmem>>) attributes {dimension_semantics = [], scalar_prefetch = 0 : i64, scratch_operands = 0 : i64, tpu.core_type = #tpu.core_type<tc>} {
    %c0 = arith.constant 0 : index
    %0 = memref.load %arg0[%c0] : memref<3xf32, #tpu.memory_space<smem>>
    %c1 = arith.constant 1 : index
    %1 = memref.load %arg0[%c1] : memref<3xf32, #tpu.memory_space<smem>>
    %c2 = arith.constant 2 : index
    %2 = memref.load %arg0[%c2] : memref<3xf32, #tpu.memory_space<smem>>
    %c0_0 = arith.constant 0 : index
    %c0_1 = arith.constant 0 : index
    %3 = vector.load %arg1[%c0_0, %c0_1] : memref<256x1xf32, #tpu.memory_space<vmem>>, vector<256x1xf32>
    %c0_2 = arith.constant 0 : index
    %c0_3 = arith.constant 0 : index
    %4 = vector.load %arg3[%c0_2, %c0_3] : memref<1x256xf32, #tpu.memory_space<vmem>>, vector<1x256xf32>
    %5 = vector.broadcast %3 : vector<256x1xf32> to vector<256x256xf32>
    %6 = vector.broadcast %4 : vector<1x256xf32> to vector<256x256xf32>
    %7 = arith.subf %5, %6 : vector<256x256xf32>
    %c0_4 = arith.constant 0 : index
    %c0_5 = arith.constant 0 : index
    %8 = vector.load %arg2[%c0_4, %c0_5] : memref<256x1xf32, #tpu.memory_space<vmem>>, vector<256x1xf32>
    %c0_6 = arith.constant 0 : index
    %c0_7 = arith.constant 0 : index
    %9 = vector.load %arg4[%c0_6, %c0_7] : memref<1x256xf32, #tpu.memory_space<vmem>>, vector<1x256xf32>
    %10 = vector.broadcast %8 : vector<256x1xf32> to vector<256x256xf32>
    %11 = vector.broadcast %9 : vector<1x256xf32> to vector<256x256xf32>
    %12 = arith.subf %10, %11 : vector<256x256xf32>
    %13 = arith.mulf %7, %7 : vector<256x256xf32>
    %14 = arith.mulf %12, %12 : vector<256x256xf32>
    %15 = arith.addf %13, %14 : vector<256x256xf32>
    %16 = vector.broadcast %1 : f32 to vector<256x256xf32>
    %17 = arith.mulf %15, %16 : vector<256x256xf32>
    %18 = math.exp %17 : vector<256x256xf32>
    %19 = vector.broadcast %0 : f32 to vector<256x256xf32>
    %20 = arith.mulf %19, %18 : vector<256x256xf32>
    %c0_8 = arith.constant 0 : index
    %c0_9 = arith.constant 0 : index
    %21 = vector.load %arg8[%c0_8, %c0_9] : memref<256x256xf32, #tpu.memory_space<vmem>>, vector<256x256xf32>
    tpu.vector_store %arg8[%c0_8, %c0_9], %20 {strides = array<i32>} : memref<256x256xf32, #tpu.memory_space<vmem>>, vector<256x256xf32>,
    %c0_10 = arith.constant 0 : index
    %c0_11 = arith.constant 0 : index
    %22 = vector.load %arg5[%c0_10, %c0_11] : memref<128x256xf32, #tpu.memory_space<vmem>>, vector<128x256xf32>
    %c0_12 = arith.constant 0 : index
    %c0_13 = arith.constant 0 : index
    %23 = vector.load %arg6[%c0_12, %c0_13] : memref<256x128xf32, #tpu.memory_space<vmem>>, vector<256x128xf32>
    %cst = arith.constant dense<0.000000e+00> : vector<256x256xf32>
    %24 = tpu.matmul %23, %22, %cst {dimension_numbers = #tpu.dot_dimension_numbers<[1], [0], [0], [1], [0, 0, 1, 1], [], []>} : vector<256x128xf32>, vector<128x256xf32>, vector<256x256xf32> -> vector<256x256xf32>
    %25 = vector.broadcast %2 : f32 to vector<256x256xf32>
    %26 = arith.mulf %25, %24 : vector<256x256xf32>
    %c0_14 = arith.constant 0 : index
    %c0_15 = arith.constant 0 : index
    %27 = vector.load %arg9[%c0_14, %c0_15] : memref<256x256xf32, #tpu.memory_space<vmem>>, vector<256x256xf32>
    tpu.vector_store %arg9[%c0_14, %c0_15], %26 {strides = array<i32>} : memref<256x256xf32, #tpu.memory_space<vmem>>, vector<256x256xf32>,
    %c0_16 = arith.constant 0 : index
    %c0_17 = arith.constant 0 : index
    %28 = vector.load %arg7[%c0_16, %c0_17] : memref<8x128xf32, #tpu.memory_space<vmem>>, vector<8x128xf32>
    %cst_18 = arith.constant dense<0.000000e+00> : vector<8x256xf32>
    %29 = tpu.matmul %28, %22, %cst_18 {dimension_numbers = #tpu.dot_dimension_numbers<[1], [0], [0], [1], [0, 0, 1, 1], [], []>} : vector<8x128xf32>, vector<128x256xf32>, vector<8x256xf32> -> vector<8x256xf32>
    %30 = vector.broadcast %2 : f32 to vector<8x256xf32>
    %31 = arith.mulf %30, %29 : vector<8x256xf32>
    %c0_19 = arith.constant 0 : index
    %c0_20 = arith.constant 0 : index
    %32 = vector.load %arg10[%c0_19, %c0_20] : memref<8x256xf32, #tpu.memory_space<vmem>>, vector<8x256xf32>
    tpu.vector_store %arg10[%c0_19, %c0_20], %31 {strides = array<i32>} : memref<8x256xf32, #tpu.memory_space<vmem>>, vector<8x256xf32>,
    return
  }
}

</mosaic_0001>

<llo_original>
// kernel: tpu_custom_call.1
$region0: #{tpu_custom_call.1}
  #allocation0 [shape = 'u32[]', space=smem, size = 0x4, offset = 0x4, fixed_abs, tag = 'smem constant byte address 0x4 - core index']
  #allocation1 [shape = 'u32[144,128]{1,0:T(1,128)}', space=vmem, size = 0x12000, scoped, tag = 'internal scratch']
  %s0 = inlined_call_operand.vmem [shape: f32[3], index: 0, kind: input, shape index: {}]
  %s1 = inlined_call_operand.vmem [shape: f32[256,1], index: 1, kind: input, shape index: {}]
  %s2 = inlined_call_operand.vmem [shape: f32[256,1], index: 2, kind: input, shape index: {}]
  %s3 = inlined_call_operand.hbm [shape: f32[1,256], index: 3, kind: input, shape index: {}]
  %s4 = inlined_call_operand.vmem [shape: f32[1,256], index: 4, kind: input, shape index: {}]
  %s5 = inlined_call_operand.vmem [shape: f32[128,256], index: 5, kind: input, shape index: {}]
  %s6 = inlined_call_operand.vmem [shape: f32[256,128], index: 6, kind: input, shape index: {}]
  %s7 = inlined_call_operand.vmem [shape: f32[8,128], index: 7, kind: input, shape index: {}]
  %s8 = inlined_call_operand.hbm [shape: f32[256,256], index: 8, kind: output, shape index: {0}]
  %s9 = inlined_call_operand.hbm [shape: f32[256,256], index: 9, kind: output, shape index: {1}]
  %s10 = inlined_call_operand.hbm [shape: f32[8,256], index: 10, kind: output, shape index: {2}]
  %11 = xla_tuple %s8, %s9, %s10
  %s12 = sld [smem:[#allocation0]]
  $region66: #{tpu_custom_call.1} parent=0
    _
  %s14 = ssub.s32 1, %s12
  %s15 = scalar_select 0, %s14, %s12
  $region1: #{tpu_custom_call.1} parent=0
    #allocation2 [shape = 'u8[512]{0}', space=smem, size = 0x200, scoped, tag = 'input window, operand 0, single buffered']
    #allocation3 [shape = 's32[1]{0}', space=sflag, size = 0x4, scoped, tag = 'scoped memory for tpu_custom_call.1']
    #allocation4 [shape = 's32[1]{0}', space=sflag, size = 0x4, scoped, tag = 'scoped memory for tpu_custom_call.1']
    #allocation5 [shape = 's32[1]{0}', space=sflag, size = 0x4, scoped, tag = 'scoped memory for tpu_custom_call.1']
    #allocation6 [shape = 'u8[1024]{0}', space=vmem, size = 0x400, scoped, tag = 'input window, operand 3, single buffered']
    #allocation7 [shape = 'u8[262144]{0}', space=vmem, size = 0x40000, scoped, tag = 'output window, operand 0, single buffered']
    #allocation8 [shape = 'u8[262144]{0}', space=vmem, size = 0x40000, scoped, tag = 'output window, operand 1, single buffered']
    #allocation9 [shape = 's32[1]{0}', space=sflag, size = 0x4, scoped, tag = 'scoped memory for tpu_custom_call.1']
    #allocation10 [shape = 'u8[8192]{0}', space=vmem, size = 0x2000, scoped, tag = 'output window, operand 2, single buffered']
    %16 = vsyncpa [#allocation5], 0
    %17 = vsyncpa [#allocation3], 0
    %18 = vsyncpa [#allocation4], 0
    %19 = vsyncpa [#allocation9], 0
    // Predicated region
    $region2: #{tpu_custom_call.1} parent=1 // pred_check
      _
    $region3: #{tpu_custom_call.1} parent=1 // pred_check_branch
      %21 = sbr.rel (0) target = $region5
    $region4: #{tpu_custom_call.1} parent=1 // pred_region
      %s23 = ssub.s32 16, 16
      %24 = vsyncadd [#allocation5], %s23
      %s26 = sshll.u32 %s0, 4
      %s27 = int_to_ptr.vmem [resolvable:$true] %s26
      %29 = dma.vmem_to_smem %s27, 16, [#allocation2], [#allocation5]
    $region5: #{tpu_custom_call.1} parent=1 // pred_fallthru
      _
    // Predicated region
    $region6: #{tpu_custom_call.1} parent=1 // pred_check
      _
    $region7: #{tpu_custom_call.1} parent=1 // pred_check_branch
      %31 = sbr.rel (0) target = $region9
    $region8: #{tpu_custom_call.1} parent=1 // pred_region
      _
    $region9: #{tpu_custom_call.1} parent=1 // pred_fallthru
      _
    // Predicated region
    $region10: #{tpu_custom_call.1} parent=1 // pred_check
      _
    $region11: #{tpu_custom_call.1} parent=1 // pred_check_branch
      %33 = sbr.rel (0) target = $region13
    $region12: #{tpu_custom_call.1} parent=1 // pred_region
      _
    $region13: #{tpu_custom_call.1} parent=1 // pred_fallthru
      _
    // Predicated region
    $region14: #{tpu_custom_call.1} parent=1 // pred_check
      _
    $region15: #{tpu_custom_call.1} parent=1 // pred_check_branch
      %35 = sbr.rel (0) target = $region17
    $region16: #{tpu_custom_call.1} parent=1 // pred_region
      %s37 = ssub.s32 32, 32
      %38 = vsyncadd [#allocation3], %s37
      %s40 = sshll.u32 [#allocation6], 4
      %s41 = int_to_ptr.vmem [resolvable:$true] %s40
      %43 = dma.hbm_to_vmem [thread:$0]  %s3, 32, %s41, [#allocation3]
    $region17: #{tpu_custom_call.1} parent=1 // pred_fallthru
      _
    // Predicated region
    $region18: #{tpu_custom_call.1} parent=1 // pred_check
      _
    $region19: #{tpu_custom_call.1} parent=1 // pred_check_branch
      %45 = sbr.rel (0) target = $region21
    $region20: #{tpu_custom_call.1} parent=1 // pred_region
      _
    $region21: #{tpu_custom_call.1} parent=1 // pred_fallthru
      _
    // Predicated region
    $region22: #{tpu_custom_call.1} parent=1 // pred_check
      _
    $region23: #{tpu_custom_call.1} parent=1 // pred_check_branch
      %47 = sbr.rel (0) target = $region25
    $region24: #{tpu_custom_call.1} parent=1 // pred_region
      _
    $region25: #{tpu_custom_call.1} parent=1 // pred_fallthru
      _
    // Predicated region
    $region26: #{tpu_custom_call.1} parent=1 // pred_check
      _
    $region27: #{tpu_custom_call.1} parent=1 // pred_check_branch
      %49 = sbr.rel (0) target = $region29
    $region28: #{tpu_custom_call.1} parent=1 // pred_region
      _
    $region29: #{tpu_custom_call.1} parent=1 // pred_fallthru
      _
    // Predicated region
    $region30: #{tpu_custom_call.1} parent=1 // pred_check
      _
    $region31: #{tpu_custom_call.1} parent=1 // pred_check_branch
      %51 = sbr.rel (0) target = $region33
    $region32: #{tpu_custom_call.1} parent=1 // pred_region
      _
    $region33: #{tpu_custom_call.1} parent=1 // pred_fallthru
      _
    // Predicated region
    $region34: #{tpu_custom_call.1} parent=1 // pred_check
      _
    $region35: #{tpu_custom_call.1} parent=1 // pred_check_branch
      %53 = sbr.rel (0) target = $region37
    $region36: #{tpu_custom_call.1} parent=1 // pred_region
      %54 = dma.done [#allocation5], 16
    $region37: #{tpu_custom_call.1} parent=1 // pred_fallthru
      _
    // Predicated region
    $region38: #{tpu_custom_call.1} parent=1 // pred_check
      _
    $region39: #{tpu_custom_call.1} parent=1 // pred_check_branch
      %56 = sbr.rel (0) target = $region41
    $region40: #{tpu_custom_call.1} parent=1 // pred_region
      %57 = dma.done [#allocation3], 32
    $region41: #{tpu_custom_call.1} parent=1 // pred_fallthru
      _
    %58 = sfence
    %s59 = sld [smem:[#allocation2]]
    %s60 = sld [smem:[#allocation2 + $0x1]]
    %s61 = sld [smem:[#allocation2 + $0x2]]
    %v62 = vld [vmem:[%s1] sm:$0xff]
    %v63 = vld [vmem:[%s1 + $0x8] sm:$0xff]
    %v64 = vld [vmem:[%s1 + $0x10] sm:$0xff]
    %v65 = vld [vmem:[%s1 + $0x18] sm:$0xff]
    %v66 = vld [vmem:[%s1 + $0x20] sm:$0xff]
    %v67 = vld [vmem:[%s1 + $0x28] sm:$0xff]
    %v68 = vld [vmem:[%s1 + $0x30] sm:$0xff]
    %v69 = vld [vmem:[%s1 + $0x38] sm:$0xff]
    %v70 = vld [vmem:[%s1 + $0x40] sm:$0xff]
    %v71 = vld [vmem:[%s1 + $0x48] sm:$0xff]
    %v72 = vld [vmem:[%s1 + $0x50] sm:$0xff]
    %v73 = vld [vmem:[%s1 + $0x58] sm:$0xff]
    %v74 = vld [vmem:[%s1 + $0x60] sm:$0xff]
    %v75 = vld [vmem:[%s1 + $0x68] sm:$0xff]
    %v76 = vld [vmem:[%s1 + $0x70] sm:$0xff]
    %v77 = vld [vmem:[%s1 + $0x78] sm:$0xff]
    %v78 = vld [vmem:[%s1 + $0x80] sm:$0xff]
    %v79 = vld [vmem:[%s1 + $0x88] sm:$0xff]
    %v80 = vld [vmem:[%s1 + $0x90] sm:$0xff]
    %v81 = vld [vmem:[%s1 + $0x98] sm:$0xff]
    %v82 = vld [vmem:[%s1 + $0xa0] sm:$0xff]
    %v83 = vld [vmem:[%s1 + $0xa8] sm:$0xff]
    %v84 = vld [vmem:[%s1 + $0xb0] sm:$0xff]
    %v85 = vld [vmem:[%s1 + $0xb8] sm:$0xff]
    %v86 = vld [vmem:[%s1 + $0xc0] sm:$0xff]
    %v87 = vld [vmem:[%s1 + $0xc8] sm:$0xff]
    %v88 = vld [vmem:[%s1 + $0xd0] sm:$0xff]
    %v89 = vld [vmem:[%s1 + $0xd8] sm:$0xff]
    %v90 = vld [vmem:[%s1 + $0xe0] sm:$0xff]
    %v91 = vld [vmem:[%s1 + $0xe8] sm:$0xff]
    %v92 = vld [vmem:[%s1 + $0xf0] sm:$0xff]
    %v93 = vld [vmem:[%s1 + $0xf8] sm:$0xff]
    %v94 = vld [vmem:[#allocation6] sm:$0x3]
    %96 = vset.pattern.permute.xlu0 0
    %97 = vperm.xlu0 %96, %v62
    %v98 = vpop.permute.xlu0 %97
    %101 = vset.pattern.permute.xlu0 0
    %102 = vperm.xlu0 %101, %v63
    %v103 = vpop.permute.xlu0 %102
    %106 = vset.pattern.permute.xlu0 0
    %107 = vperm.xlu0 %106, %v64
    %v108 = vpop.permute.xlu0 %107
    %111 = vset.pattern.permute.xlu0 0
    %112 = vperm.xlu0 %111, %v65
    %v113 = vpop.permute.xlu0 %112
    %116 = vset.pattern.permute.xlu0 0
    %117 = vperm.xlu0 %116, %v66
    %v118 = vpop.permute.xlu0 %117
    %121 = vset.pattern.permute.xlu0 0
    %122 = vperm.xlu0 %121, %v67
    %v123 = vpop.permute.xlu0 %122
    %126 = vset.pattern.permute.xlu0 0
    %127 = vperm.xlu0 %126, %v68
    %v128 = vpop.permute.xlu0 %127
    %131 = vset.pattern.permute.xlu0 0
    %132 = vperm.xlu0 %131, %v69
    %v133 = vpop.permute.xlu0 %132
    %136 = vset.pattern.permute.xlu0 0
    %137 = vperm.xlu0 %136, %v70
    %v138 = vpop.permute.xlu0 %137
    %141 = vset.pattern.permute.xlu0 0
    %142 = vperm.xlu0 %141, %v71
    %v143 = vpop.permute.xlu0 %142
    %146 = vset.pattern.permute.xlu0 0
    %147 = vperm.xlu0 %146, %v72
    %v148 = vpop.permute.xlu0 %147
    %151 = vset.pattern.permute.xlu0 0
    %152 = vperm.xlu0 %151, %v73
    %v153 = vpop.permute.xlu0 %152
    %156 = vset.pattern.permute.xlu0 0
    %157 = vperm.xlu0 %156, %v74
    %v158 = vpop.permute.xlu0 %157
    %161 = vset.pattern.permute.xlu0 0
    %162 = vperm.xlu0 %161, %v75
    %v163 = vpop.permute.xlu0 %162
    %166 = vset.pattern.permute.xlu0 0
    %167 = vperm.xlu0 %166, %v76
    %v168 = vpop.permute.xlu0 %167
    %171 = vset.pattern.permute.xlu0 0
    %172 = vperm.xlu0 %171, %v77
    %v173 = vpop.permute.xlu0 %172
    %176 = vset.pattern.permute.xlu0 0
    %177 = vperm.xlu0 %176, %v78
    %v178 = vpop.permute.xlu0 %177
    %181 = vset.pattern.permute.xlu0 0
    %182 = vperm.xlu0 %181, %v79
    %v183 = vpop.permute.xlu0 %182
    %186 = vset.pattern.permute.xlu0 0
    %187 = vperm.xlu0 %186, %v80
    %v188 = vpop.permute.xlu0 %187
    %191 = vset.pattern.permute.xlu0 0
    %192 = vperm.xlu0 %191, %v81
    %v193 = vpop.permute.xlu0 %192
    %196 = vset.pattern.permute.xlu0 0
    %197 = vperm.xlu0 %196, %v82
    %v198 = vpop.permute.xlu0 %197
    %201 = vset.pattern.permute.xlu0 0
    %202 = vperm.xlu0 %201, %v83
    %v203 = vpop.permute.xlu0 %202
    %206 = vset.pattern.permute.xlu0 0
    %207 = vperm.xlu0 %206, %v84
    %v208 = vpop.permute.xlu0 %207
    %211 = vset.pattern.permute.xlu0 0
    %212 = vperm.xlu0 %211, %v85
    %v213 = vpop.permute.xlu0 %212
    %216 = vset.pattern.permute.xlu0 0
    %217 = vperm.xlu0 %216, %v86
    %v218 = vpop.permute.xlu0 %217
    %221 = vset.pattern.permute.xlu0 0
    %222 = vperm.xlu0 %221, %v87
    %v223 = vpop.permute.xlu0 %222
    %226 = vset.pattern.permute.xlu0 0
    %227 = vperm.xlu0 %226, %v88
    %v228 = vpop.permute.xlu0 %227
    %231 = vset.pattern.permute.xlu0 0
    %232 = vperm.xlu0 %231, %v89
    %v233 = vpop.permute.xlu0 %232
    %236 = vset.pattern.permute.xlu0 0
    %237 = vperm.xlu0 %236, %v90
    %v238 = vpop.permute.xlu0 %237
    %241 = vset.pattern.permute.xlu0 0
    %242 = vperm.xlu0 %241, %v91
    %v243 = vpop.permute.xlu0 %242
    %246 = vset.pattern.permute.xlu0 0
    %247 = vperm.xlu0 %246, %v92
    %v248 = vpop.permute.xlu0 %247
    %251 = vset.pattern.permute.xlu0 0
    %252 = vperm.xlu0 %251, %v93
    %v253 = vpop.permute.xlu0 %252
    %v256 = vlaneseq
    %v257 = vshrl.u32 %v256, 7
    %v258 = vsub.s32 0, %v257
    %v259 = vrot.slane %v94, %v258
    %v260 = vlaneseq
    %v261 = vshrl.u32 %v260, 7
    %v262 = vsub.s32 1, %v261
    %v263 = vrot.slane %v94, %v262
    %v266 = vsub.f32 %v98, %v259
    %v267 = vsub.f32 %v98, %v263
    %v268 = vsub.f32 %v103, %v259
    %v269 = vsub.f32 %v103, %v263
    %v270 = vsub.f32 %v108, %v259
    %v271 = vsub.f32 %v108, %v263
    %v272 = vsub.f32 %v113, %v259
    %v273 = vsub.f32 %v113, %v263
    %v274 = vsub.f32 %v118, %v259
    %v275 = vsub.f32 %v118, %v263
    %v276 = vsub.f32 %v123, %v259
    %v277 = vsub.f32 %v123, %v263
    %v278 = vsub.f32 %v128, %v259
    %v279 = vsub.f32 %v128, %v263
    %v280 = vsub.f32 %v133, %v259
    %v281 = vsub.f32 %v133, %v263
    %v282 = vsub.f32 %v138, %v259
    %v283 = vsub.f32 %v138, %v263
    %v284 = vsub.f32 %v143, %v259
    %v285 = vsub.f32 %v143, %v263
    %v286 = vsub.f32 %v148, %v259
    %v287 = vsub.f32 %v148, %v263
    %v288 = vsub.f32 %v153, %v259
    %v289 = vsub.f32 %v153, %v263
    %v290 = vsub.f32 %v158, %v259
    %v291 = vsub.f32 %v158, %v263
    %v292 = vsub.f32 %v163, %v259
    %v293 = vsub.f32 %v163, %v263
    %v294 = vsub.f32 %v168, %v259
    %v295 = vsub.f32 %v168, %v263
    %v296 = vsub.f32 %v173, %v259
    %v297 = vsub.f32 %v173, %v263
    %v298 = vsub.f32 %v178, %v259
    %v299 = vsub.f32 %v178, %v263
    %v300 = vsub.f32 %v183, %v259
    %v301 = vsub.f32 %v183, %v263
    %v302 = vsub.f32 %v188, %v259
    %v303 = vsub.f32 %v188, %v263
    %v304 = vsub.f32 %v193, %v259
    %v305 = vsub.f32 %v193, %v263
    %v306 = vsub.f32 %v198, %v259
    %v307 = vsub.f32 %v198, %v263
    %v308 = vsub.f32 %v203, %v259
    %v309 = vsub.f32 %v203, %v263
    %v310 = vsub.f32 %v208, %v259
    %v311 = vsub.f32 %v208, %v263
    %v312 = vsub.f32 %v213, %v259
    %v313 = vsub.f32 %v213, %v263
    %v314 = vsub.f32 %v218, %v259
    %v315 = vsub.f32 %v218, %v263
    %v316 = vsub.f32 %v223, %v259
    %v317 = vsub.f32 %v223, %v263
    %v318 = vsub.f32 %v228, %v259
    %v319 = vsub.f32 %v228, %v263
    %v320 = vsub.f32 %v233, %v259
    %v321 = vsub.f32 %v233, %v263
    %v322 = vsub.f32 %v238, %v259
    %v323 = vsub.f32 %v238, %v263
    %v324 = vsub.f32 %v243, %v259
    %v325 = vsub.f32 %v243, %v263
    %v326 = vsub.f32 %v248, %v259
    %v327 = vsub.f32 %v248, %v263
    %v328 = vsub.f32 %v253, %v259
    %v329 = vsub.f32 %v253, %v263
    %v330 = vld [vmem:[%s2] sm:$0xff]
    %v331 = vld [vmem:[%s2 + $0x8] sm:$0xff]
    %v332 = vld [vmem:[%s2 + $0x10] sm:$0xff]
    %v333 = vld [vmem:[%s2 + $0x18] sm:$0xff]
    %v334 = vld [vmem:[%s2 + $0x20] sm:$0xff]
    %v335 = vld [vmem:[%s2 + $0x28] sm:$0xff]
    %v336 = vld [vmem:[%s2 + $0x30] sm:$0xff]
    %v337 = vld [vmem:[%s2 + $0x38] sm:$0xff]
    %v338 = vld [vmem:[%s2 + $0x40] sm:$0xff]
    %v339 = vld [vmem:[%s2 + $0x48] sm:$0xff]
    %v340 = vld [vmem:[%s2 + $0x50] sm:$0xff]
    %v341 = vld [vmem:[%s2 + $0x58] sm:$0xff]
    %v342 = vld [vmem:[%s2 + $0x60] sm:$0xff]
    %v343 = vld [vmem:[%s2 + $0x68] sm:$0xff]
    %v344 = vld [vmem:[%s2 + $0x70] sm:$0xff]
    %v345 = vld [vmem:[%s2 + $0x78] sm:$0xff]
    %v346 = vld [vmem:[%s2 + $0x80] sm:$0xff]
    %v347 = vld [vmem:[%s2 + $0x88] sm:$0xff]
    %v348 = vld [vmem:[%s2 + $0x90] sm:$0xff]
    %v349 = vld [vmem:[%s2 + $0x98] sm:$0xff]
    %v350 = vld [vmem:[%s2 + $0xa0] sm:$0xff]
    %v351 = vld [vmem:[%s2 + $0xa8] sm:$0xff]
    %v352 = vld [vmem:[%s2 + $0xb0] sm:$0xff]
    %v353 = vld [vmem:[%s2 + $0xb8] sm:$0xff]
    %v354 = vld [vmem:[%s2 + $0xc0] sm:$0xff]
    %v355 = vld [vmem:[%s2 + $0xc8] sm:$0xff]
    %v356 = vld [vmem:[%s2 + $0xd0] sm:$0xff]
    %v357 = vld [vmem:[%s2 + $0xd8] sm:$0xff]
    %v358 = vld [vmem:[%s2 + $0xe0] sm:$0xff]
    %v359 = vld [vmem:[%s2 + $0xe8] sm:$0xff]
    %v360 = vld [vmem:[%s2 + $0xf0] sm:$0xff]
    %v361 = vld [vmem:[%s2 + $0xf8] sm:$0xff]
    %v362 = vld [vmem:[%s4] sm:$0x3]
    %364 = vset.pattern.permute.xlu0 0
    %365 = vperm.xlu0 %364, %v330
    %v366 = vpop.permute.xlu0 %365
    %369 = vset.pattern.permute.xlu0 0
    %370 = vperm.xlu0 %369, %v331
    %v371 = vpop.permute.xlu0 %370
    %374 = vset.pattern.permute.xlu0 0
    %375 = vperm.xlu0 %374, %v332
    %v376 = vpop.permute.xlu0 %375
    %379 = vset.pattern.permute.xlu0 0
    %380 = vperm.xlu0 %379, %v333
    %v381 = vpop.permute.xlu0 %380
    %384 = vset.pattern.permute.xlu0 0
    %385 = vperm.xlu0 %384, %v334
    %v386 = vpop.permute.xlu0 %385
    %389 = vset.pattern.permute.xlu0 0
    %390 = vperm.xlu0 %389, %v335
    %v391 = vpop.permute.xlu0 %390
    %394 = vset.pattern.permute.xlu0 0
    %395 = vperm.xlu0 %394, %v336
    %v396 = vpop.permute.xlu0 %395
    %399 = vset.pattern.permute.xlu0 0
    %400 = vperm.xlu0 %399, %v337
    %v401 = vpop.permute.xlu0 %400
    %404 = vset.pattern.permute.xlu0 0
    %405 = vperm.xlu0 %404, %v338
    %v406 = vpop.permute.xlu0 %405
    %409 = vset.pattern.permute.xlu0 0
    %410 = vperm.xlu0 %409, %v339
    %v411 = vpop.permute.xlu0 %410
    %414 = vset.pattern.permute.xlu0 0
    %415 = vperm.xlu0 %414, %v340
    %v416 = vpop.permute.xlu0 %415
    %419 = vset.pattern.permute.xlu0 0
    %420 = vperm.xlu0 %419, %v341
    %v421 = vpop.permute.xlu0 %420
    %424 = vset.pattern.permute.xlu0 0
    %425 = vperm.xlu0 %424, %v342
    %v426 = vpop.permute.xlu0 %425
    %429 = vset.pattern.permute.xlu0 0
    %430 = vperm.xlu0 %429, %v343
    %v431 = vpop.permute.xlu0 %430
    %434 = vset.pattern.permute.xlu0 0
    %435 = vperm.xlu0 %434, %v344
    %v436 = vpop.permute.xlu0 %435
    %439 = vset.pattern.permute.xlu0 0
    %440 = vperm.xlu0 %439, %v345
    %v441 = vpop.permute.xlu0 %440
    %444 = vset.pattern.permute.xlu0 0
    %445 = vperm.xlu0 %444, %v346
    %v446 = vpop.permute.xlu0 %445
    %449 = vset.pattern.permute.xlu0 0
    %450 = vperm.xlu0 %449, %v347
    %v451 = vpop.permute.xlu0 %450
    %454 = vset.pattern.permute.xlu0 0
    %455 = vperm.xlu0 %454, %v348
    %v456 = vpop.permute.xlu0 %455
    %459 = vset.pattern.permute.xlu0 0
    %460 = vperm.xlu0 %459, %v349
    %v461 = vpop.permute.xlu0 %460
    %464 = vset.pattern.permute.xlu0 0
    %465 = vperm.xlu0 %464, %v350
    %v466 = vpop.permute.xlu0 %465
    %469 = vset.pattern.permute.xlu0 0
    %470 = vperm.xlu0 %469, %v351
    %v471 = vpop.permute.xlu0 %470
    %474 = vset.pattern.permute.xlu0 0
    %475 = vperm.xlu0 %474, %v352
    %v476 = vpop.permute.xlu0 %475
    %479 = vset.pattern.permute.xlu0 0
    %480 = vperm.xlu0 %479, %v353
    %v481 = vpop.permute.xlu0 %480
    %484 = vset.pattern.permute.xlu0 0
    %485 = vperm.xlu0 %484, %v354
    %v486 = vpop.permute.xlu0 %485
    %489 = vset.pattern.permute.xlu0 0
    %490 = vperm.xlu0 %489, %v355
    %v491 = vpop.permute.xlu0 %490
    %494 = vset.pattern.permute.xlu0 0
    %495 = vperm.xlu0 %494, %v356
    %v496 = vpop.permute.xlu0 %495
    %499 = vset.pattern.permute.xlu0 0
    %500 = vperm.xlu0 %499, %v357
    %v501 = vpop.permute.xlu0 %500
    %504 = vset.pattern.permute.xlu0 0
    %505 = vperm.xlu0 %504, %v358
    %v506 = vpop.permute.xlu0 %505
    %509 = vset.pattern.permute.xlu0 0
    %510 = vperm.xlu0 %509, %v359
    %v511 = vpop.permute.xlu0 %510
    %514 = vset.pattern.permute.xlu0 0
    %515 = vperm.xlu0 %514, %v360
    %v516 = vpop.permute.xlu0 %515
    %519 = vset.pattern.permute.xlu0 0
    %520 = vperm.xlu0 %519, %v361
    %v521 = vpop.permute.xlu0 %520
    %v524 = vlaneseq
    %v525 = vshrl.u32 %v524, 7
    %v526 = vsub.s32 0, %v525
    %v527 = vrot.slane %v362, %v526
    %v528 = vlaneseq
    %v529 = vshrl.u32 %v528, 7
    %v530 = vsub.s32 1, %v529
    %v531 = vrot.slane %v362, %v530
    %v534 = vsub.f32 %v366, %v527
    %v535 = vsub.f32 %v366, %v531
    %v536 = vsub.f32 %v371, %v527
    %v537 = vsub.f32 %v371, %v531
    %v538 = vsub.f32 %v376, %v527
    %v539 = vsub.f32 %v376, %v531
    %v540 = vsub.f32 %v381, %v527
    %v541 = vsub.f32 %v381, %v531
    %v542 = vsub.f32 %v386, %v527
    %v543 = vsub.f32 %v386, %v531
    %v544 = vsub.f32 %v391, %v527
    %v545 = vsub.f32 %v391, %v531
    %v546 = vsub.f32 %v396, %v527
    %v547 = vsub.f32 %v396, %v531
    %v548 = vsub.f32 %v401, %v527
    %v549 = vsub.f32 %v401, %v531
    %v550 = vsub.f32 %v406, %v527
    %v551 = vsub.f32 %v406, %v531
    %v552 = vsub.f32 %v411, %v527
    %v553 = vsub.f32 %v411, %v531
    %v554 = vsub.f32 %v416, %v527
    %v555 = vsub.f32 %v416, %v531
    %v556 = vsub.f32 %v421, %v527
    %v557 = vsub.f32 %v421, %v531
    %v558 = vsub.f32 %v426, %v527
    %v559 = vsub.f32 %v426, %v531
    %v560 = vsub.f32 %v431, %v527
    %v561 = vsub.f32 %v431, %v531
    %v562 = vsub.f32 %v436, %v527
    %v563 = vsub.f32 %v436, %v531
    %v564 = vsub.f32 %v441, %v527
    %v565 = vsub.f32 %v441, %v531
    %v566 = vsub.f32 %v446, %v527
    %v567 = vsub.f32 %v446, %v531
    %v568 = vsub.f32 %v451, %v527
    %v569 = vsub.f32 %v451, %v531
    %v570 = vsub.f32 %v456, %v527
    %v571 = vsub.f32 %v456, %v531
    %v572 = vsub.f32 %v461, %v527
    %v573 = vsub.f32 %v461, %v531
    %v574 = vsub.f32 %v466, %v527
    %v575 = vsub.f32 %v466, %v531
    %v576 = vsub.f32 %v471, %v527
    %v577 = vsub.f32 %v471, %v531
    %v578 = vsub.f32 %v476, %v527
    %v579 = vsub.f32 %v476, %v531
    %v580 = vsub.f32 %v481, %v527
    %v581 = vsub.f32 %v481, %v531
    %v582 = vsub.f32 %v486, %v527
    %v583 = vsub.f32 %v486, %v531
    %v584 = vsub.f32 %v491, %v527
    %v585 = vsub.f32 %v491, %v531
    %v586 = vsub.f32 %v496, %v527
    %v587 = vsub.f32 %v496, %v531
    %v588 = vsub.f32 %v501, %v527
    %v589 = vsub.f32 %v501, %v531
    %v590 = vsub.f32 %v506, %v527
    %v591 = vsub.f32 %v506, %v531
    %v592 = vsub.f32 %v511, %v527
    %v593 = vsub.f32 %v511, %v531
    %v594 = vsub.f32 %v516, %v527
    %v595 = vsub.f32 %v516, %v531
    %v596 = vsub.f32 %v521, %v527
    %v597 = vsub.f32 %v521, %v531
    %v598 = vmul.f32 %v266, %v266
    %v599 = vmul.f32 %v267, %v267
    %v600 = vmul.f32 %v268, %v268
    %v601 = vmul.f32 %v269, %v269
    %v602 = vmul.f32 %v270, %v270
    %v603 = vmul.f32 %v271, %v271
    %v604 = vmul.f32 %v272, %v272
    %v605 = vmul.f32 %v273, %v273
    %v606 = vmul.f32 %v274, %v274
    %v607 = vmul.f32 %v275, %v275
    %v608 = vmul.f32 %v276, %v276
    %v609 = vmul.f32 %v277, %v277
    %v610 = vmul.f32 %v278, %v278
    %v611 = vmul.f32 %v279, %v279
    %v612 = vmul.f32 %v280, %v280
    %v613 = vmul.f32 %v281, %v281
    %v614 = vmul.f32 %v282, %v282
    %v615 = vmul.f32 %v283, %v283
    %v616 = vmul.f32 %v284, %v284
    %v617 = vmul.f32 %v285, %v285
    %v618 = vmul.f32 %v286, %v286
    %v619 = vmul.f32 %v287, %v287
    %v620 = vmul.f32 %v288, %v288
    %v621 = vmul.f32 %v289, %v289
    %v622 = vmul.f32 %v290, %v290
    %v623 = vmul.f32 %v291, %v291
    %v624 = vmul.f32 %v292, %v292
    %v625 = vmul.f32 %v293, %v293
    %v626 = vmul.f32 %v294, %v294
    %v627 = vmul.f32 %v295, %v295
    %v628 = vmul.f32 %v296, %v296
    %v629 = vmul.f32 %v297, %v297
    %v630 = vmul.f32 %v298, %v298
    %v631 = vmul.f32 %v299, %v299
    %v632 = vmul.f32 %v300, %v300
    %v633 = vmul.f32 %v301, %v301
    %v634 = vmul.f32 %v302, %v302
    %v635 = vmul.f32 %v303, %v303
    %v636 = vmul.f32 %v304, %v304
    %v637 = vmul.f32 %v305, %v305
    %v638 = vmul.f32 %v306, %v306
    %v639 = vmul.f32 %v307, %v307
    %v640 = vmul.f32 %v308, %v308
    %v641 = vmul.f32 %v309, %v309
    %v642 = vmul.f32 %v310, %v310
    %v643 = vmul.f32 %v311, %v311
    %v644 = vmul.f32 %v312, %v312
    %v645 = vmul.f32 %v313, %v313
    %v646 = vmul.f32 %v314, %v314
    %v647 = vmul.f32 %v315, %v315
    %v648 = vmul.f32 %v316, %v316
    %v649 = vmul.f32 %v317, %v317
    %v650 = vmul.f32 %v318, %v318
    %v651 = vmul.f32 %v319, %v319
    %v652 = vmul.f32 %v320, %v320
    %v653 = vmul.f32 %v321, %v321
    %v654 = vmul.f32 %v322, %v322
    %v655 = vmul.f32 %v323, %v323
    %v656 = vmul.f32 %v324, %v324
    %v657 = vmul.f32 %v325, %v325
    %v658 = vmul.f32 %v326, %v326
    %v659 = vmul.f32 %v327, %v327
    %v660 = vmul.f32 %v328, %v328
    %v661 = vmul.f32 %v329, %v329
    %v662 = vmul.f32 %v534, %v534
    %v663 = vmul.f32 %v535, %v535
    %v664 = vmul.f32 %v536, %v536
    %v665 = vmul.f32 %v537, %v537
    %v666 = vmul.f32 %v538, %v538
    %v667 = vmul.f32 %v539, %v539
    %v668 = vmul.f32 %v540, %v540
    %v669 = vmul.f32 %v541, %v541
    %v670 = vmul.f32 %v542, %v542
    %v671 = vmul.f32 %v543, %v543
    %v672 = vmul.f32 %v544, %v544
    %v673 = vmul.f32 %v545, %v545
    %v674 = vmul.f32 %v546, %v546
    %v675 = vmul.f32 %v547, %v547
    %v676 = vmul.f32 %v548, %v548
    %v677 = vmul.f32 %v549, %v549
    %v678 = vmul.f32 %v550, %v550
    %v679 = vmul.f32 %v551, %v551
    %v680 = vmul.f32 %v552, %v552
    %v681 = vmul.f32 %v553, %v553
    %v682 = vmul.f32 %v554, %v554
    %v683 = vmul.f32 %v555, %v555
    %v684 = vmul.f32 %v556, %v556
    %v685 = vmul.f32 %v557, %v557
    %v686 = vmul.f32 %v558, %v558
    %v687 = vmul.f32 %v559, %v559
    %v688 = vmul.f32 %v560, %v560
    %v689 = vmul.f32 %v561, %v561
    %v690 = vmul.f32 %v562, %v562
    %v691 = vmul.f32 %v563, %v563
    %v692 = vmul.f32 %v564, %v564
    %v693 = vmul.f32 %v565, %v565
    %v694 = vmul.f32 %v566, %v566
    %v695 = vmul.f32 %v567, %v567
    %v696 = vmul.f32 %v568, %v568
    %v697 = vmul.f32 %v569, %v569
    %v698 = vmul.f32 %v570, %v570
    %v699 = vmul.f32 %v571, %v571
    %v700 = vmul.f32 %v572, %v572
    %v701 = vmul.f32 %v573, %v573
    %v702 = vmul.f32 %v574, %v574
    %v703 = vmul.f32 %v575, %v575
    %v704 = vmul.f32 %v576, %v576
    %v705 = vmul.f32 %v577, %v577
    %v706 = vmul.f32 %v578, %v578
    %v707 = vmul.f32 %v579, %v579
    %v708 = vmul.f32 %v580, %v580
    %v709 = vmul.f32 %v581, %v581
    %v710 = vmul.f32 %v582, %v582
    %v711 = vmul.f32 %v583, %v583
    %v712 = vmul.f32 %v584, %v584
    %v713 = vmul.f32 %v585, %v585
    %v714 = vmul.f32 %v586, %v586
    %v715 = vmul.f32 %v587, %v587
    %v716 = vmul.f32 %v588, %v588
    %v717 = vmul.f32 %v589, %v589
    %v718 = vmul.f32 %v590, %v590
    %v719 = vmul.f32 %v591, %v591
    %v720 = vmul.f32 %v592, %v592
    %v721 = vmul.f32 %v593, %v593
    %v722 = vmul.f32 %v594, %v594
    %v723 = vmul.f32 %v595, %v595
    %v724 = vmul.f32 %v596, %v596
    %v725 = vmul.f32 %v597, %v597
    %v726 = vadd.f32 %v598, %v662
    %v727 = vadd.f32 %v599, %v663
    %v728 = vadd.f32 %v600, %v664
    %v729 = vadd.f32 %v601, %v665
    %v730 = vadd.f32 %v602, %v666
    %v731 = vadd.f32 %v603, %v667
    %v732 = vadd.f32 %v604, %v668
    %v733 = vadd.f32 %v605, %v669
    %v734 = vadd.f32 %v606, %v670
    %v735 = vadd.f32 %v607, %v671
    %v736 = vadd.f32 %v608, %v672
    %v737 = vadd.f32 %v609, %v673
    %v738 = vadd.f32 %v610, %v674
    %v739 = vadd.f32 %v611, %v675
    %v740 = vadd.f32 %v612, %v676
    %v741 = vadd.f32 %v613, %v677
    %v742 = vadd.f32 %v614, %v678
    %v743 = vadd.f32 %v615, %v679
    %v744 = vadd.f32 %v616, %v680
    %v745 = vadd.f32 %v617, %v681
    %v746 = vadd.f32 %v618, %v682
    %v747 = vadd.f32 %v619, %v683
    %v748 = vadd.f32 %v620, %v684
    %v749 = vadd.f32 %v621, %v685
    %v750 = vadd.f32 %v622, %v686
    %v751 = vadd.f32 %v623, %v687
    %v752 = vadd.f32 %v624, %v688
    %v753 = vadd.f32 %v625, %v689
    %v754 = vadd.f32 %v626, %v690
    %v755 = vadd.f32 %v627, %v691
    %v756 = vadd.f32 %v628, %v692
    %v757 = vadd.f32 %v629, %v693
    %v758 = vadd.f32 %v630, %v694
    %v759 = vadd.f32 %v631, %v695
    %v760 = vadd.f32 %v632, %v696
    %v761 = vadd.f32 %v633, %v697
    %v762 = vadd.f32 %v634, %v698
    %v763 = vadd.f32 %v635, %v699
    %v764 = vadd.f32 %v636, %v700
    %v765 = vadd.f32 %v637, %v701
    %v766 = vadd.f32 %v638, %v702
    %v767 = vadd.f32 %v639, %v703
    %v768 = vadd.f32 %v640, %v704
    %v769 = vadd.f32 %v641, %v705
    %v770 = vadd.f32 %v642, %v706
    %v771 = vadd.f32 %v643, %v707
    %v772 = vadd.f32 %v644, %v708
    %v773 = vadd.f32 %v645, %v709
    %v774 = vadd.f32 %v646, %v710
    %v775 = vadd.f32 %v647, %v711
    %v776 = vadd.f32 %v648, %v712
    %v777 = vadd.f32 %v649, %v713
    %v778 = vadd.f32 %v650, %v714
    %v779 = vadd.f32 %v651, %v715
    %v780 = vadd.f32 %v652, %v716
    %v781 = vadd.f32 %v653, %v717
    %v782 = vadd.f32 %v654, %v718
    %v783 = vadd.f32 %v655, %v719
    %v784 = vadd.f32 %v656, %v720
    %v785 = vadd.f32 %v657, %v721
    %v786 = vadd.f32 %v658, %v722
    %v787 = vadd.f32 %v659, %v723
    %v788 = vadd.f32 %v660, %v724
    %v789 = vadd.f32 %v661, %v725
    %v790 = vstv %s60
    %v791 = vmul.f32 %v726, %v790
    %v792 = vmul.f32 %v727, %v790
    %v793 = vmul.f32 %v728, %v790
    %v794 = vmul.f32 %v729, %v790
    %v795 = vmul.f32 %v730, %v790
    %v796 = vmul.f32 %v731, %v790
    %v797 = vmul.f32 %v732, %v790
    %v798 = vmul.f32 %v733, %v790
    %v799 = vmul.f32 %v734, %v790
    %v800 = vmul.f32 %v735, %v790
    %v801 = vmul.f32 %v736, %v790
    %v802 = vmul.f32 %v737, %v790
    %v803 = vmul.f32 %v738, %v790
    %v804 = vmul.f32 %v739, %v790
    %v805 = vmul.f32 %v740, %v790
    %v806 = vmul.f32 %v741, %v790
    %v807 = vmul.f32 %v742, %v790
    %v808 = vmul.f32 %v743, %v790
    %v809 = vmul.f32 %v744, %v790
    %v810 = vmul.f32 %v745, %v790
    %v811 = vmul.f32 %v746, %v790
    %v812 = vmul.f32 %v747, %v790
    %v813 = vmul.f32 %v748, %v790
    %v814 = vmul.f32 %v749, %v790
    %v815 = vmul.f32 %v750, %v790
    %v816 = vmul.f32 %v751, %v790
    %v817 = vmul.f32 %v752, %v790
    %v818 = vmul.f32 %v753, %v790
    %v819 = vmul.f32 %v754, %v790
    %v820 = vmul.f32 %v755, %v790
    %v821 = vmul.f32 %v756, %v790
    %v822 = vmul.f32 %v757, %v790
    %v823 = vmul.f32 %v758, %v790
    %v824 = vmul.f32 %v759, %v790
    %v825 = vmul.f32 %v760, %v790
    %v826 = vmul.f32 %v761, %v790
    %v827 = vmul.f32 %v762, %v790
    %v828 = vmul.f32 %v763, %v790
    %v829 = vmul.f32 %v764, %v790
    %v830 = vmul.f32 %v765, %v790
    %v831 = vmul.f32 %v766, %v790
    %v832 = vmul.f32 %v767, %v790
    %v833 = vmul.f32 %v768, %v790
    %v834 = vmul.f32 %v769, %v790
    %v835 = vmul.f32 %v770, %v790
    %v836 = vmul.f32 %v771, %v790
    %v837 = vmul.f32 %v772, %v790
    %v838 = vmul.f32 %v773, %v790
    %v839 = vmul.f32 %v774, %v790
    %v840 = vmul.f32 %v775, %v790
    %v841 = vmul.f32 %v776, %v790
    %v842 = vmul.f32 %v777, %v790
    %v843 = vmul.f32 %v778, %v790
    %v844 = vmul.f32 %v779, %v790
    %v845 = vmul.f32 %v780, %v790
    %v846 = vmul.f32 %v781, %v790
    %v847 = vmul.f32 %v782, %v790
    %v848 = vmul.f32 %v783, %v790
    %v849 = vmul.f32 %v784, %v790
    %v850 = vmul.f32 %v785, %v790
    %v851 = vmul.f32 %v786, %v790
    %v852 = vmul.f32 %v787, %v790
    %v853 = vmul.f32 %v788, %v790
    %v854 = vmul.f32 %v789, %v790
    %v855 = vmul.f32 %v791, 1.442695
    %v856 = vpow.pop %v855
    %v857 = vmul.f32 %v792, 1.442695
    %v858 = vpow.pop %v857
    %v859 = vmul.f32 %v793, 1.442695
    %v860 = vpow.pop %v859
    %v861 = vmul.f32 %v794, 1.442695
    %v862 = vpow.pop %v861
    %v863 = vmul.f32 %v795, 1.442695
    %v864 = vpow.pop %v863
    %v865 = vmul.f32 %v796, 1.442695
    %v866 = vpow.pop %v865
    %v867 = vmul.f32 %v797, 1.442695
    %v868 = vpow.pop %v867
    %v869 = vmul.f32 %v798, 1.442695
    %v870 = vpow.pop %v869
    %v871 = vmul.f32 %v799, 1.442695
    %v872 = vpow.pop %v871
    %v873 = vmul.f32 %v800, 1.442695
    %v874 = vpow.pop %v873
    %v875 = vmul.f32 %v801, 1.442695
    %v876 = vpow.pop %v875
    %v877 = vmul.f32 %v802, 1.442695
    %v878 = vpow.pop %v877
    %v879 = vmul.f32 %v803, 1.442695
    %v880 = vpow.pop %v879
    %v881 = vmul.f32 %v804, 1.442695
    %v882 = vpow.pop %v881
    %v883 = vmul.f32 %v805, 1.442695
    %v884 = vpow.pop %v883
    %v885 = vmul.f32 %v806, 1.442695
    %v886 = vpow.pop %v885
    %v887 = vmul.f32 %v807, 1.442695
    %v888 = vpow.pop %v887
    %v889 = vmul.f32 %v808, 1.442695
    %v890 = vpow.pop %v889
    %v891 = vmul.f32 %v809, 1.442695
    %v892 = vpow.pop %v891
    %v893 = vmul.f32 %v810, 1.442695
    %v894 = vpow.pop %v893
    %v895 = vmul.f32 %v811, 1.442695
    %v896 = vpow.pop %v895
    %v897 = vmul.f32 %v812, 1.442695
    %v898 = vpow.pop %v897
    %v899 = vmul.f32 %v813, 1.442695
    %v900 = vpow.pop %v899
    %v901 = vmul.f32 %v814, 1.442695
    %v902 = vpow.pop %v901
    %v903 = vmul.f32 %v815, 1.442695
    %v904 = vpow.pop %v903
    %v905 = vmul.f32 %v816, 1.442695
    %v906 = vpow.pop %v905
    %v907 = vmul.f32 %v817, 1.442695
    %v908 = vpow.pop %v907
    %v909 = vmul.f32 %v818, 1.442695
    %v910 = vpow.pop %v909
    %v911 = vmul.f32 %v819, 1.442695
    %v912 = vpow.pop %v911
    %v913 = vmul.f32 %v820, 1.442695
    %v914 = vpow.pop %v913
    %v915 = vmul.f32 %v821, 1.442695
    %v916 = vpow.pop %v915
    %v917 = vmul.f32 %v822, 1.442695
    %v918 = vpow.pop %v917
    %v919 = vmul.f32 %v823, 1.442695
    %v920 = vpow.pop %v919
    %v921 = vmul.f32 %v824, 1.442695
    %v922 = vpow.pop %v921
    %v923 = vmul.f32 %v825, 1.442695
    %v924 = vpow.pop %v923
    %v925 = vmul.f32 %v826, 1.442695
    %v926 = vpow.pop %v925
    %v927 = vmul.f32 %v827, 1.442695
    %v928 = vpow.pop %v927
    %v929 = vmul.f32 %v828, 1.442695
    %v930 = vpow.pop %v929
    %v931 = vmul.f32 %v829, 1.442695
    %v932 = vpow.pop %v931
    %v933 = vmul.f32 %v830, 1.442695
    %v934 = vpow.pop %v933
    %v935 = vmul.f32 %v831, 1.442695
    %v936 = vpow.pop %v935
    %v937 = vmul.f32 %v832, 1.442695
    %v938 = vpow.pop %v937
    %v939 = vmul.f32 %v833, 1.442695
    %v940 = vpow.pop %v939
    %v941 = vmul.f32 %v834, 1.442695
    %v942 = vpow.pop %v941
    %v943 = vmul.f32 %v835, 1.442695
    %v944 = vpow.pop %v943
    %v945 = vmul.f32 %v836, 1.442695
    %v946 = vpow.pop %v945
    %v947 = vmul.f32 %v837, 1.442695
    %v948 = vpow.pop %v947
    %v949 = vmul.f32 %v838, 1.442695
    %v950 = vpow.pop %v949
    %v951 = vmul.f32 %v839, 1.442695
    %v952 = vpow.pop %v951
    %v953 = vmul.f32 %v840, 1.442695
    %v954 = vpow.pop %v953
    %v955 = vmul.f32 %v841, 1.442695
    %v956 = vpow.pop %v955
    %v957 = vmul.f32 %v842, 1.442695
    %v958 = vpow.pop %v957
    %v959 = vmul.f32 %v843, 1.442695
    %v960 = vpow.pop %v959
    %v961 = vmul.f32 %v844, 1.442695
    %v962 = vpow.pop %v961
    %v963 = vmul.f32 %v845, 1.442695
    %v964 = vpow.pop %v963
    %v965 = vmul.f32 %v846, 1.442695
    %v966 = vpow.pop %v965
    %v967 = vmul.f32 %v847, 1.442695
    %v968 = vpow.pop %v967
    %v969 = vmul.f32 %v848, 1.442695
    %v970 = vpow.pop %v969
    %v971 = vmul.f32 %v849, 1.442695
    %v972 = vpow.pop %v971
    %v973 = vmul.f32 %v850, 1.442695
    %v974 = vpow.pop %v973
    %v975 = vmul.f32 %v851, 1.442695
    %v976 = vpow.pop %v975
    %v977 = vmul.f32 %v852, 1.442695
    %v978 = vpow.pop %v977
    %v979 = vmul.f32 %v853, 1.442695
    %v980 = vpow.pop %v979
    %v981 = vmul.f32 %v854, 1.442695
    %v982 = vpow.pop %v981
    %v983 = vstv %s59
    %v984 = vmul.f32 %v983, %v856
    %v985 = vmul.f32 %v983, %v858
    %v986 = vmul.f32 %v983, %v860
    %v987 = vmul.f32 %v983, %v862
    %v988 = vmul.f32 %v983, %v864
    %v989 = vmul.f32 %v983, %v866
    %v990 = vmul.f32 %v983, %v868
    %v991 = vmul.f32 %v983, %v870
    %v992 = vmul.f32 %v983, %v872
    %v993 = vmul.f32 %v983, %v874
    %v994 = vmul.f32 %v983, %v876
    %v995 = vmul.f32 %v983, %v878
    %v996 = vmul.f32 %v983, %v880
    %v997 = vmul.f32 %v983, %v882
    %v998 = vmul.f32 %v983, %v884
    %v999 = vmul.f32 %v983, %v886
    %v1000 = vmul.f32 %v983, %v888
    %v1001 = vmul.f32 %v983, %v890
    %v1002 = vmul.f32 %v983, %v892
    %v1003 = vmul.f32 %v983, %v894
    %v1004 = vmul.f32 %v983, %v896
    %v1005 = vmul.f32 %v983, %v898
    %v1006 = vmul.f32 %v983, %v900
    %v1007 = vmul.f32 %v983, %v902
    %v1008 = vmul.f32 %v983, %v904
    %v1009 = vmul.f32 %v983, %v906
    %v1010 = vmul.f32 %v983, %v908
    %v1011 = vmul.f32 %v983, %v910
    %v1012 = vmul.f32 %v983, %v912
    %v1013 = vmul.f32 %v983, %v914
    %v1014 = vmul.f32 %v983, %v916
    %v1015 = vmul.f32 %v983, %v918
    %v1016 = vmul.f32 %v983, %v920
    %v1017 = vmul.f32 %v983, %v922
    %v1018 = vmul.f32 %v983, %v924
    %v1019 = vmul.f32 %v983, %v926
    %v1020 = vmul.f32 %v983, %v928
    %v1021 = vmul.f32 %v983, %v930
    %v1022 = vmul.f32 %v983, %v932
    %v1023 = vmul.f32 %v983, %v934
    %v1024 = vmul.f32 %v983, %v936
    %v1025 = vmul.f32 %v983, %v938
    %v1026 = vmul.f32 %v983, %v940
    %v1027 = vmul.f32 %v983, %v942
    %v1028 = vmul.f32 %v983, %v944
    %v1029 = vmul.f32 %v983, %v946
    %v1030 = vmul.f32 %v983, %v948
    %v1031 = vmul.f32 %v983, %v950
    %v1032 = vmul.f32 %v983, %v952
    %v1033 = vmul.f32 %v983, %v954
    %v1034 = vmul.f32 %v983, %v956
    %v1035 = vmul.f32 %v983, %v958
    %v1036 = vmul.f32 %v983, %v960
    %v1037 = vmul.f32 %v983, %v962
    %v1038 = vmul.f32 %v983, %v964
    %v1039 = vmul.f32 %v983, %v966
    %v1040 = vmul.f32 %v983, %v968
    %v1041 = vmul.f32 %v983, %v970
    %v1042 = vmul.f32 %v983, %v972
    %v1043 = vmul.f32 %v983, %v974
    %v1044 = vmul.f32 %v983, %v976
    %v1045 = vmul.f32 %v983, %v978
    %v1046 = vmul.f32 %v983, %v980
    %v1047 = vmul.f32 %v983, %v982
    %1048 = vst [vmem:[#allocation7] sm:$0xff] %v984
    %1049 = vst [vmem:[#allocation7 + $0x8] sm:$0xff] %v985
    %1050 = vst [vmem:[#allocation7 + $0x10] sm:$0xff] %v986
    %1051 = vst [vmem:[#allocation7 + $0x18] sm:$0xff] %v987
    %1052 = vst [vmem:[#allocation7 + $0x20] sm:$0xff] %v988
    %1053 = vst [vmem:[#allocation7 + $0x28] sm:$0xff] %v989
    %1054 = vst [vmem:[#allocation7 + $0x30] sm:$0xff] %v990
    %1055 = vst [vmem:[#allocation7 + $0x38] sm:$0xff] %v991
    %1056 = vst [vmem:[#allocation7 + $0x40] sm:$0xff] %v992
    %1057 = vst [vmem:[#allocation7 + $0x48] sm:$0xff] %v993
    %1058 = vst [vmem:[#allocation7 + $0x50] sm:$0xff] %v994
    %1059 = vst [vmem:[#allocation7 + $0x58] sm:$0xff] %v995
    %1060 = vst [vmem:[#allocation7 + $0x60] sm:$0xff] %v996
    %1061 = vst [vmem:[#allocation7 + $0x68] sm:$0xff] %v997
    %1062 = vst [vmem:[#allocation7 + $0x70] sm:$0xff] %v998
    %1063 = vst [vmem:[#allocation7 + $0x78] sm:$0xff] %v999
    %1064 = vst [vmem:[#allocation7 + $0x80] sm:$0xff] %v1000
    %1065 = vst [vmem:[#allocation7 + $0x88] sm:$0xff] %v1001
    %1066 = vst [vmem:[#allocation7 + $0x90] sm:$0xff] %v1002
    %1067 = vst [vmem:[#allocation7 + $0x98] sm:$0xff] %v1003
    %1068 = vst [vmem:[#allocation7 + $0xa0] sm:$0xff] %v1004
    %1069 = vst [vmem:[#allocation7 + $0xa8] sm:$0xff] %v1005
    %1070 = vst [vmem:[#allocation7 + $0xb0] sm:$0xff] %v1006
    %1071 = vst [vmem:[#allocation7 + $0xb8] sm:$0xff] %v1007
    %1072 = vst [vmem:[#allocation7 + $0xc0] sm:$0xff] %v1008
    %1073 = vst [vmem:[#allocation7 + $0xc8] sm:$0xff] %v1009
    %1074 = vst [vmem:[#allocation7 + $0xd0] sm:$0xff] %v1010
    %1075 = vst [vmem:[#allocation7 + $0xd8] sm:$0xff] %v1011
    %1076 = vst [vmem:[#allocation7 + $0xe0] sm:$0xff] %v1012
    %1077 = vst [vmem:[#allocation7 + $0xe8] sm:$0xff] %v1013
    %1078 = vst [vmem:[#allocation7 + $0xf0] sm:$0xff] %v1014
    %1079 = vst [vmem:[#allocation7 + $0xf8] sm:$0xff] %v1015
    %1080 = vst [vmem:[#allocation7 + $0x100] sm:$0xff] %v1016
    %1081 = vst [vmem:[#allocation7 + $0x108] sm:$0xff] %v1017
    %1082 = vst [vmem:[#allocation7 + $0x110] sm:$0xff] %v1018
    %1083 = vst [vmem:[#allocation7 + $0x118] sm:$0xff] %v1019
    %1084 = vst [vmem:[#allocation7 + $0x120] sm:$0xff] %v1020
    %1085 = vst [vmem:[#allocation7 + $0x128] sm:$0xff] %v1021
    %1086 = vst [vmem:[#allocation7 + $0x130] sm:$0xff] %v1022
    %1087 = vst [vmem:[#allocation7 + $0x138] sm:$0xff] %v1023
    %1088 = vst [vmem:[#allocation7 + $0x140] sm:$0xff] %v1024
    %1089 = vst [vmem:[#allocation7 + $0x148] sm:$0xff] %v1025
    %1090 = vst [vmem:[#allocation7 + $0x150] sm:$0xff] %v1026
    %1091 = vst [vmem:[#allocation7 + $0x158] sm:$0xff] %v1027
    %1092 = vst [vmem:[#allocation7 + $0x160] sm:$0xff] %v1028
    %1093 = vst [vmem:[#allocation7 + $0x168] sm:$0xff] %v1029
    %1094 = vst [vmem:[#allocation7 + $0x170] sm:$0xff] %v1030
    %1095 = vst [vmem:[#allocation7 + $0x178] sm:$0xff] %v1031
    %1096 = vst [vmem:[#allocation7 + $0x180] sm:$0xff] %v1032
    %1097 = vst [vmem:[#allocation7 + $0x188] sm:$0xff] %v1033
    %1098 = vst [vmem:[#allocation7 + $0x190] sm:$0xff] %v1034
    %1099 = vst [vmem:[#allocation7 + $0x198] sm:$0xff] %v1035
    %1100 = vst [vmem:[#allocation7 + $0x1a0] sm:$0xff] %v1036
    %1101 = vst [vmem:[#allocation7 + $0x1a8] sm:$0xff] %v1037
    %1102 = vst [vmem:[#allocation7 + $0x1b0] sm:$0xff] %v1038
    %1103 = vst [vmem:[#allocation7 + $0x1b8] sm:$0xff] %v1039
    %1104 = vst [vmem:[#allocation7 + $0x1c0] sm:$0xff] %v1040
    %1105 = vst [vmem:[#allocation7 + $0x1c8] sm:$0xff] %v1041
    %1106 = vst [vmem:[#allocation7 + $0x1d0] sm:$0xff] %v1042
    %1107 = vst [vmem:[#allocation7 + $0x1d8] sm:$0xff] %v1043
    %1108 = vst [vmem:[#allocation7 + $0x1e0] sm:$0xff] %v1044
    %1109 = vst [vmem:[#allocation7 + $0x1e8] sm:$0xff] %v1045
    %1110 = vst [vmem:[#allocation7 + $0x1f0] sm:$0xff] %v1046
    %1111 = vst [vmem:[#allocation7 + $0x1f8] sm:$0xff] %v1047
    %v1112 = vld [vmem:[%s5] sm:$0xff]
    %v1113 = vld [vmem:[%s5 + $0x8] sm:$0xff]
    %v1114 = vld [vmem:[%s5 + $0x10] sm:$0xff]
    %v1115 = vld [vmem:[%s5 + $0x18] sm:$0xff]
    %v1116 = vld [vmem:[%s5 + $0x20] sm:$0xff]
    %v1117 = vld [vmem:[%s5 + $0x28] sm:$0xff]
    %v1118 = vld [vmem:[%s5 + $0x30] sm:$0xff]
    %v1119 = vld [vmem:[%s5 + $0x38] sm:$0xff]
    %v1120 = vld [vmem:[%s5 + $0x40] sm:$0xff]
    %v1121 = vld [vmem:[%s5 + $0x48] sm:$0xff]
    %v1122 = vld [vmem:[%s5 + $0x50] sm:$0xff]
    %v1123 = vld [vmem:[%s5 + $0x58] sm:$0xff]
    %v1124 = vld [vmem:[%s5 + $0x60] sm:$0xff]
    %v1125 = vld [vmem:[%s5 + $0x68] sm:$0xff]
    %v1126 = vld [vmem:[%s5 + $0x70] sm:$0xff]
    %v1127 = vld [vmem:[%s5 + $0x78] sm:$0xff]
    %v1128 = vld [vmem:[%s5 + $0x80] sm:$0xff]
    %v1129 = vld [vmem:[%s5 + $0x88] sm:$0xff]
    %v1130 = vld [vmem:[%s5 + $0x90] sm:$0xff]
    %v1131 = vld [vmem:[%s5 + $0x98] sm:$0xff]
    %v1132 = vld [vmem:[%s5 + $0xa0] sm:$0xff]
    %v1133 = vld [vmem:[%s5 + $0xa8] sm:$0xff]
    %v1134 = vld [vmem:[%s5 + $0xb0] sm:$0xff]
    %v1135 = vld [vmem:[%s5 + $0xb8] sm:$0xff]
    %v1136 = vld [vmem:[%s5 + $0xc0] sm:$0xff]
    %v1137 = vld [vmem:[%s5 + $0xc8] sm:$0xff]
    %v1138 = vld [vmem:[%s5 + $0xd0] sm:$0xff]
    %v1139 = vld [vmem:[%s5 + $0xd8] sm:$0xff]
    %v1140 = vld [vmem:[%s5 + $0xe0] sm:$0xff]
    %v1141 = vld [vmem:[%s5 + $0xe8] sm:$0xff]
    %v1142 = vld [vmem:[%s5 + $0xf0] sm:$0xff]
    %v1143 = vld [vmem:[%s5 + $0xf8] sm:$0xff]
    %v1144 = vld [vmem:[%s6] sm:$0xff]
    %v1145 = vld [vmem:[%s6 + $0x8] sm:$0xff]
    %v1146 = vld [vmem:[%s6 + $0x10] sm:$0xff]
    %v1147 = vld [vmem:[%s6 + $0x18] sm:$0xff]
    %v1148 = vld [vmem:[%s6 + $0x20] sm:$0xff]
    %v1149 = vld [vmem:[%s6 + $0x28] sm:$0xff]
    %v1150 = vld [vmem:[%s6 + $0x30] sm:$0xff]
    %v1151 = vld [vmem:[%s6 + $0x38] sm:$0xff]
    %v1152 = vld [vmem:[%s6 + $0x40] sm:$0xff]
    %v1153 = vld [vmem:[%s6 + $0x48] sm:$0xff]
    %v1154 = vld [vmem:[%s6 + $0x50] sm:$0xff]
    %v1155 = vld [vmem:[%s6 + $0x58] sm:$0xff]
    %v1156 = vld [vmem:[%s6 + $0x60] sm:$0xff]
    %v1157 = vld [vmem:[%s6 + $0x68] sm:$0xff]
    %v1158 = vld [vmem:[%s6 + $0x70] sm:$0xff]
    %v1159 = vld [vmem:[%s6 + $0x78] sm:$0xff]
    %v1160 = vld [vmem:[%s6 + $0x80] sm:$0xff]
    %v1161 = vld [vmem:[%s6 + $0x88] sm:$0xff]
    %v1162 = vld [vmem:[%s6 + $0x90] sm:$0xff]
    %v1163 = vld [vmem:[%s6 + $0x98] sm:$0xff]
    %v1164 = vld [vmem:[%s6 + $0xa0] sm:$0xff]
    %v1165 = vld [vmem:[%s6 + $0xa8] sm:$0xff]
    %v1166 = vld [vmem:[%s6 + $0xb0] sm:$0xff]
    %v1167 = vld [vmem:[%s6 + $0xb8] sm:$0xff]
    %v1168 = vld [vmem:[%s6 + $0xc0] sm:$0xff]
    %v1169 = vld [vmem:[%s6 + $0xc8] sm:$0xff]
    %v1170 = vld [vmem:[%s6 + $0xd0] sm:$0xff]
    %v1171 = vld [vmem:[%s6 + $0xd8] sm:$0xff]
    %v1172 = vld [vmem:[%s6 + $0xe0] sm:$0xff]
    %v1173 = vld [vmem:[%s6 + $0xe8] sm:$0xff]
    %v1174 = vld [vmem:[%s6 + $0xf0] sm:$0xff]
    %v1175 = vld [vmem:[%s6 + $0xf8] sm:$0xff]
    %1176 = vmatprep.subr.mxu0 %v1113
    %1177 = vmatpush1.msra.mxu0 %v1112
    %1178 = vmatprep.subr.mxu0 %v1115
    %1179 = vmatpush1.msra.mxu0 %v1114
    %1180 = vmatprep.subr.mxu0 %v1117
    %1181 = vmatpush1.msra.mxu0 %v1116
    %1182 = vmatprep.subr.mxu0 %v1119
    %1183 = vmatpush1.msra.mxu0 %v1118
    %1184 = vmatprep.subr.mxu0 %v1121
    %1185 = vmatpush1.msra.mxu0 %v1120
    %1186 = vmatprep.subr.mxu0 %v1123
    %1187 = vmatpush1.msra.mxu0 %v1122
    %1188 = vmatprep.subr.mxu0 %v1125
    %1189 = vmatpush1.msra.mxu0 %v1124
    %1190 = vmatprep.subr.mxu0 %v1127
    %1191 = vmatpush1.msra.mxu0 %v1126
    %1192 = vmatprep.subr.mxu0 %v1129
    %1193 = vmatpush1.msra.mxu0 %v1128
    %1194 = vmatprep.subr.mxu0 %v1131
    %1195 = vmatpush1.msra.mxu0 %v1130
    %1196 = vmatprep.subr.mxu0 %v1133
    %1197 = vmatpush1.msra.mxu0 %v1132
    %1198 = vmatprep.subr.mxu0 %v1135
    %1199 = vmatpush1.msra.mxu0 %v1134
    %1200 = vmatprep.subr.mxu0 %v1137
    %1201 = vmatpush1.msra.mxu0 %v1136
    %1202 = vmatprep.subr.mxu0 %v1139
    %1203 = vmatpush1.msra.mxu0 %v1138
    %1204 = vmatprep.subr.mxu0 %v1141
    %1205 = vmatpush1.msra.mxu0 %v1140
    %1206 = vmatprep.subr.mxu0 %v1143
    %1207 = vmatpush1.msra.mxu0 %v1142
    %1208 = vmatprep.subr.mxu0 0.0
    %1209 = vmatpush1.msra.mxu0 0.0
    %1210 = vmatprep.subr.mxu0 0.0
    %1211 = vmatpush1.msra.mxu0 0.0
    %1212 = vmatprep.subr.mxu0 0.0
    %1213 = vmatpush1.msra.mxu0 0.0
    %1214 = vmatprep.subr.mxu0 0.0
    %1215 = vmatpush1.msra.mxu0 0.0
    %1216 = vmatprep.subr.mxu0 0.0
    %1217 = vmatpush1.msra.mxu0 0.0
    %1218 = vmatprep.subr.mxu0 0.0
    %1219 = vmatpush1.msra.mxu0 0.0
    %1220 = vmatprep.subr.mxu0 0.0
    %1221 = vmatpush1.msra.mxu0 0.0
    %1222 = vmatprep.subr.mxu0 0.0
    %1223 = vmatpush1.msra.mxu0 0.0
    %1224 = vmatprep.subr.mxu0 0.0
    %1225 = vmatpush1.msra.mxu0 0.0
    %1226 = vmatprep.subr.mxu0 0.0
    %1227 = vmatpush1.msra.mxu0 0.0
    %1228 = vmatprep.subr.mxu0 0.0
    %1229 = vmatpush1.msra.mxu0 0.0
    %1230 = vmatprep.subr.mxu0 0.0
    %1231 = vmatpush1.msra.mxu0 0.0
    %1232 = vmatprep.subr.mxu0 0.0
    %1233 = vmatpush1.msra.mxu0 0.0
    %1234 = vmatprep.subr.mxu0 0.0
    %1235 = vmatpush1.msra.mxu0 0.0
    %1236 = vmatprep.subr.mxu0 0.0
    %1237 = vmatpush1.msra.mxu0 0.0
    %1238 = vmatprep.subr.mxu0 0.0
    %1239 = vmatpush1.msra.mxu0 0.0
    %1240 = vmatprep.mubr.f32.mxu0 0.0
    %1241 = vmatmul.mubr.f32.gmra.mrb[0].mxu0 %v1144
    %v1242 = vpop.f32.mrb[0].mxu0
    %v1243 = vadd.f32 0.0, %v1242
    %v1244 = vpop.f32.mrb[0].mxu0
    %v1245 = vadd.f32 0.0, %v1244
    %1246 = vmatprep.mubr.f32.mxu0 0.0
    %1247 = vmatmul.mubr.f32.gmra.mrb[0].mxu0 %v1145
    %v1248 = vpop.f32.mrb[0].mxu0
    %v1249 = vadd.f32 0.0, %v1248
    %v1250 = vpop.f32.mrb[0].mxu0
    %v1251 = vadd.f32 0.0, %v1250
    %1252 = vmatprep.mubr.f32.mxu0 0.0
    %1253 = vmatmul.mubr.f32.gmra.mrb[0].mxu0 %v1146
    %v1254 = vpop.f32.mrb[0].mxu0
    %v1255 = vadd.f32 0.0, %v1254
    %v1256 = vpop.f32.mrb[0].mxu0
    %v1257 = vadd.f32 0.0, %v1256
    %1258 = vmatprep.mubr.f32.mxu0 0.0
    %1259 = vmatmul.mubr.f32.gmra.mrb[0].mxu0 %v1147
    %v1260 = vpop.f32.mrb[0].mxu0
    %v1261 = vadd.f32 0.0, %v1260
    %v1262 = vpop.f32.mrb[0].mxu0
    %v1263 = vadd.f32 0.0, %v1262
    %1264 = vmatprep.mubr.f32.mxu0 0.0
    %1265 = vmatmul.mubr.f32.gmra.mrb[0].mxu0 %v1148
    %v1266 = vpop.f32.mrb[0].mxu0
    %v1267 = vadd.f32 0.0, %v1266
    %v1268 = vpop.f32.mrb[0].mxu0
    %v1269 = vadd.f32 0.0, %v1268
    %1270 = vmatprep.mubr.f32.mxu0 0.0
    %1271 = vmatmul.mubr.f32.gmra.mrb[0].mxu0 %v1149
    %v1272 = vpop.f32.mrb[0].mxu0
    %v1273 = vadd.f32 0.0, %v1272
    %v1274 = vpop.f32.mrb[0].mxu0
    %v1275 = vadd.f32 0.0, %v1274
    %1276 = vmatprep.mubr.f32.mxu0 0.0
    %1277 = vmatmul.mubr.f32.gmra.mrb[0].mxu0 %v1150
    %v1278 = vpop.f32.mrb[0].mxu0
    %v1279 = vadd.f32 0.0, %v1278
    %v1280 = vpop.f32.mrb[0].mxu0
    %v1281 = vadd.f32 0.0, %v1280
    %1282 = vmatprep.mubr.f32.mxu0 0.0
    %1283 = vmatmul.mubr.f32.gmra.mrb[0].mxu0 %v1151
    %v1284 = vpop.f32.mrb[0].mxu0
    %v1285 = vadd.f32 0.0, %v1284
    %v1286 = vpop.f32.mrb[0].mxu0
    %v1287 = vadd.f32 0.0, %v1286
    %1288 = vmatprep.mubr.f32.mxu0 0.0
    %1289 = vmatmul.mubr.f32.gmra.mrb[0].mxu0 %v1152
    %v1290 = vpop.f32.mrb[0].mxu0
    %v1291 = vadd.f32 0.0, %v1290
    %v1292 = vpop.f32.mrb[0].mxu0
    %v1293 = vadd.f32 0.0, %v1292
    %1294 = vmatprep.mubr.f32.mxu0 0.0
    %1295 = vmatmul.mubr.f32.gmra.mrb[0].mxu0 %v1153
    %v1296 = vpop.f32.mrb[0].mxu0
    %v1297 = vadd.f32 0.0, %v1296
    %v1298 = vpop.f32.mrb[0].mxu0
    %v1299 = vadd.f32 0.0, %v1298
    %1300 = vmatprep.mubr.f32.mxu0 0.0
    %1301 = vmatmul.mubr.f32.gmra.mrb[0].mxu0 %v1154
    %v1302 = vpop.f32.mrb[0].mxu0
    %v1303 = vadd.f32 0.0, %v1302
    %v1304 = vpop.f32.mrb[0].mxu0
    %v1305 = vadd.f32 0.0, %v1304
    %1306 = vmatprep.mubr.f32.mxu0 0.0
    %1307 = vmatmul.mubr.f32.gmra.mrb[0].mxu0 %v1155
    %v1308 = vpop.f32.mrb[0].mxu0
    %v1309 = vadd.f32 0.0, %v1308
    %v1310 = vpop.f32.mrb[0].mxu0
    %v1311 = vadd.f32 0.0, %v1310
    %1312 = vmatprep.mubr.f32.mxu0 0.0
    %1313 = vmatmul.mubr.f32.gmra.mrb[0].mxu0 %v1156
    %v1314 = vpop.f32.mrb[0].mxu0
    %v1315 = vadd.f32 0.0, %v1314
    %v1316 = vpop.f32.mrb[0].mxu0
    %v1317 = vadd.f32 0.0, %v1316
    %1318 = vmatprep.mubr.f32.mxu0 0.0
    %1319 = vmatmul.mubr.f32.gmra.mrb[0].mxu0 %v1157
    %v1320 = vpop.f32.mrb[0].mxu0
    %v1321 = vadd.f32 0.0, %v1320
    %v1322 = vpop.f32.mrb[0].mxu0
    %v1323 = vadd.f32 0.0, %v1322
    %1324 = vmatprep.mubr.f32.mxu0 0.0
    %1325 = vmatmul.mubr.f32.gmra.mrb[0].mxu0 %v1158
    %v1326 = vpop.f32.mrb[0].mxu0
    %v1327 = vadd.f32 0.0, %v1326
    %v1328 = vpop.f32.mrb[0].mxu0
    %v1329 = vadd.f32 0.0, %v1328
    %1330 = vmatprep.mubr.f32.mxu0 0.0
    %1331 = vmatmul.mubr.f32.gmra.mrb[0].mxu0 %v1159
    %v1332 = vpop.f32.mrb[0].mxu0
    %v1333 = vadd.f32 0.0, %v1332
    %v1334 = vpop.f32.mrb[0].mxu0
    %v1335 = vadd.f32 0.0, %v1334
    %1336 = vmatprep.mubr.f32.mxu0 0.0
    %1337 = vmatmul.mubr.f32.gmra.mrb[0].mxu0 %v1160
    %v1338 = vpop.f32.mrb[0].mxu0
    %v1339 = vadd.f32 0.0, %v1338
    %v1340 = vpop.f32.mrb[0].mxu0
    %v1341 = vadd.f32 0.0, %v1340
    %1342 = vmatprep.mubr.f32.mxu0 0.0
    %1343 = vmatmul.mubr.f32.gmra.mrb[0].mxu0 %v1161
    %v1344 = vpop.f32.mrb[0].mxu0
    %v1345 = vadd.f32 0.0, %v1344
    %v1346 = vpop.f32.mrb[0].mxu0
    %v1347 = vadd.f32 0.0, %v1346
    %1348 = vmatprep.mubr.f32.mxu0 0.0
    %1349 = vmatmul.mubr.f32.gmra.mrb[0].mxu0 %v1162
    %v1350 = vpop.f32.mrb[0].mxu0
    %v1351 = vadd.f32 0.0, %v1350
    %v1352 = vpop.f32.mrb[0].mxu0
    %v1353 = vadd.f32 0.0, %v1352
    %1354 = vmatprep.mubr.f32.mxu0 0.0
    %1355 = vmatmul.mubr.f32.gmra.mrb[0].mxu0 %v1163
    %v1356 = vpop.f32.mrb[0].mxu0
    %v1357 = vadd.f32 0.0, %v1356
    %v1358 = vpop.f32.mrb[0].mxu0
    %v1359 = vadd.f32 0.0, %v1358
    %1360 = vmatprep.mubr.f32.mxu0 0.0
    %1361 = vmatmul.mubr.f32.gmra.mrb[0].mxu0 %v1164
    %v1362 = vpop.f32.mrb[0].mxu0
    %v1363 = vadd.f32 0.0, %v1362
    %v1364 = vpop.f32.mrb[0].mxu0
    %v1365 = vadd.f32 0.0, %v1364
    %1366 = vmatprep.mubr.f32.mxu0 0.0
    %1367 = vmatmul.mubr.f32.gmra.mrb[0].mxu0 %v1165
    %v1368 = vpop.f32.mrb[0].mxu0
    %v1369 = vadd.f32 0.0, %v1368
    %v1370 = vpop.f32.mrb[0].mxu0
    %v1371 = vadd.f32 0.0, %v1370
    %1372 = vmatprep.mubr.f32.mxu0 0.0
    %1373 = vmatmul.mubr.f32.gmra.mrb[0].mxu0 %v1166
    %v1374 = vpop.f32.mrb[0].mxu0
    %v1375 = vadd.f32 0.0, %v1374
    %v1376 = vpop.f32.mrb[0].mxu0
    %v1377 = vadd.f32 0.0, %v1376
    %1378 = vmatprep.mubr.f32.mxu0 0.0
    %1379 = vmatmul.mubr.f32.gmra.mrb[0].mxu0 %v1167
    %v1380 = vpop.f32.mrb[0].mxu0
    %v1381 = vadd.f32 0.0, %v1380
    %v1382 = vpop.f32.mrb[0].mxu0
    %v1383 = vadd.f32 0.0, %v1382
    %1384 = vmatprep.mubr.f32.mxu0 0.0
    %1385 = vmatmul.mubr.f32.gmra.mrb[0].mxu0 %v1168
    %v1386 = vpop.f32.mrb[0].mxu0
    %v1387 = vadd.f32 0.0, %v1386
    %v1388 = vpop.f32.mrb[0].mxu0
    %v1389 = vadd.f32 0.0, %v1388
    %1390 = vmatprep.mubr.f32.mxu0 0.0
    %1391 = vmatmul.mubr.f32.gmra.mrb[0].mxu0 %v1169
    %v1392 = vpop.f32.mrb[0].mxu0
    %v1393 = vadd.f32 0.0, %v1392
    %v1394 = vpop.f32.mrb[0].mxu0
    %v1395 = vadd.f32 0.0, %v1394
    %1396 = vmatprep.mubr.f32.mxu0 0.0
    %1397 = vmatmul.mubr.f32.gmra.mrb[0].mxu0 %v1170
    %v1398 = vpop.f32.mrb[0].mxu0
    %v1399 = vadd.f32 0.0, %v1398
    %v1400 = vpop.f32.mrb[0].mxu0
    %v1401 = vadd.f32 0.0, %v1400
    %1402 = vmatprep.mubr.f32.mxu0 0.0
    %1403 = vmatmul.mubr.f32.gmra.mrb[0].mxu0 %v1171
    %v1404 = vpop.f32.mrb[0].mxu0
    %v1405 = vadd.f32 0.0, %v1404
    %v1406 = vpop.f32.mrb[0].mxu0
    %v1407 = vadd.f32 0.0, %v1406
    %1408 = vmatprep.mubr.f32.mxu0 0.0
    %1409 = vmatmul.mubr.f32.gmra.mrb[0].mxu0 %v1172
    %v1410 = vpop.f32.mrb[0].mxu0
    %v1411 = vadd.f32 0.0, %v1410
    %v1412 = vpop.f32.mrb[0].mxu0
    %v1413 = vadd.f32 0.0, %v1412
    %1414 = vmatprep.mubr.f32.mxu0 0.0
    %1415 = vmatmul.mubr.f32.gmra.mrb[0].mxu0 %v1173
    %v1416 = vpop.f32.mrb[0].mxu0
    %v1417 = vadd.f32 0.0, %v1416
    %v1418 = vpop.f32.mrb[0].mxu0
    %v1419 = vadd.f32 0.0, %v1418
    %1420 = vmatprep.mubr.f32.mxu0 0.0
    %1421 = vmatmul.mubr.f32.gmra.mrb[0].mxu0 %v1174
    %v1422 = vpop.f32.mrb[0].mxu0
    %v1423 = vadd.f32 0.0, %v1422
    %v1424 = vpop.f32.mrb[0].mxu0
    %v1425 = vadd.f32 0.0, %v1424
    %1426 = vmatprep.mubr.f32.mxu0 0.0
    %1427 = vmatmul.mubr.f32.gmra.mrb[0].mxu0 %v1175
    %v1428 = vpop.f32.mrb[0].mxu0
    %v1429 = vadd.f32 0.0, %v1428
    %v1430 = vpop.f32.mrb[0].mxu0
    %v1431 = vadd.f32 0.0, %v1430
    %1432 = vdwg.mxu0
    %v1433 = vstv %s61
    %v1434 = vmul.f32 %v1433, %v1243
    %v1435 = vmul.f32 %v1433, %v1245
    %v1436 = vmul.f32 %v1433, %v1249
    %v1437 = vmul.f32 %v1433, %v1251
    %v1438 = vmul.f32 %v1433, %v1255
    %v1439 = vmul.f32 %v1433, %v1257
    %v1440 = vmul.f32 %v1433, %v1261
    %v1441 = vmul.f32 %v1433, %v1263
    %v1442 = vmul.f32 %v1433, %v1267
    %v1443 = vmul.f32 %v1433, %v1269
    %v1444 = vmul.f32 %v1433, %v1273
    %v1445 = vmul.f32 %v1433, %v1275
    %v1446 = vmul.f32 %v1433, %v1279
    %v1447 = vmul.f32 %v1433, %v1281
    %v1448 = vmul.f32 %v1433, %v1285
    %v1449 = vmul.f32 %v1433, %v1287
    %v1450 = vmul.f32 %v1433, %v1291
    %v1451 = vmul.f32 %v1433, %v1293
    %v1452 = vmul.f32 %v1433, %v1297
    %v1453 = vmul.f32 %v1433, %v1299
    %v1454 = vmul.f32 %v1433, %v1303
    %v1455 = vmul.f32 %v1433, %v1305
    %v1456 = vmul.f32 %v1433, %v1309
    %v1457 = vmul.f32 %v1433, %v1311
    %v1458 = vmul.f32 %v1433, %v1315
    %v1459 = vmul.f32 %v1433, %v1317
    %v1460 = vmul.f32 %v1433, %v1321
    %v1461 = vmul.f32 %v1433, %v1323
    %v1462 = vmul.f32 %v1433, %v1327
    %v1463 = vmul.f32 %v1433, %v1329
    %v1464 = vmul.f32 %v1433, %v1333
    %v1465 = vmul.f32 %v1433, %v1335
    %v1466 = vmul.f32 %v1433, %v1339
    %v1467 = vmul.f32 %v1433, %v1341
    %v1468 = vmul.f32 %v1433, %v1345
    %v1469 = vmul.f32 %v1433, %v1347
    %v1470 = vmul.f32 %v1433, %v1351
    %v1471 = vmul.f32 %v1433, %v1353
    %v1472 = vmul.f32 %v1433, %v1357
    %v1473 = vmul.f32 %v1433, %v1359
    %v1474 = vmul.f32 %v1433, %v1363
    %v1475 = vmul.f32 %v1433, %v1365
    %v1476 = vmul.f32 %v1433, %v1369
    %v1477 = vmul.f32 %v1433, %v1371
    %v1478 = vmul.f32 %v1433, %v1375
    %v1479 = vmul.f32 %v1433, %v1377
    %v1480 = vmul.f32 %v1433, %v1381
    %v1481 = vmul.f32 %v1433, %v1383
    %v1482 = vmul.f32 %v1433, %v1387
    %v1483 = vmul.f32 %v1433, %v1389
    %v1484 = vmul.f32 %v1433, %v1393
    %v1485 = vmul.f32 %v1433, %v1395
    %v1486 = vmul.f32 %v1433, %v1399
    %v1487 = vmul.f32 %v1433, %v1401
    %v1488 = vmul.f32 %v1433, %v1405
    %v1489 = vmul.f32 %v1433, %v1407
    %v1490 = vmul.f32 %v1433, %v1411
    %v1491 = vmul.f32 %v1433, %v1413
    %v1492 = vmul.f32 %v1433, %v1417
    %v1493 = vmul.f32 %v1433, %v1419
    %v1494 = vmul.f32 %v1433, %v1423
    %v1495 = vmul.f32 %v1433, %v1425
    %v1496 = vmul.f32 %v1433, %v1429
    %v1497 = vmul.f32 %v1433, %v1431
    %1498 = vst [vmem:[#allocation8] sm:$0xff] %v1434
    %1499 = vst [vmem:[#allocation8 + $0x8] sm:$0xff] %v1435
    %1500 = vst [vmem:[#allocation8 + $0x10] sm:$0xff] %v1436
    %1501 = vst [vmem:[#allocation8 + $0x18] sm:$0xff] %v1437
    %1502 = vst [vmem:[#allocation8 + $0x20] sm:$0xff] %v1438
    %1503 = vst [vmem:[#allocation8 + $0x28] sm:$0xff] %v1439
    %1504 = vst [vmem:[#allocation8 + $0x30] sm:$0xff] %v1440
    %1505 = vst [vmem:[#allocation8 + $0x38] sm:$0xff] %v1441
    %1506 = vst [vmem:[#allocation8 + $0x40] sm:$0xff] %v1442
    %1507 = vst [vmem:[#allocation8 + $0x48] sm:$0xff] %v1443
    %1508 = vst [vmem:[#allocation8 + $0x50] sm:$0xff] %v1444
    %1509 = vst [vmem:[#allocation8 + $0x58] sm:$0xff] %v1445
    %1510 = vst [vmem:[#allocation8 + $0x60] sm:$0xff] %v1446
    %1511 = vst [vmem:[#allocation8 + $0x68] sm:$0xff] %v1447
    %1512 = vst [vmem:[#allocation8 + $0x70] sm:$0xff] %v1448
    %1513 = vst [vmem:[#allocation8 + $0x78] sm:$0xff] %v1449
    %1514 = vst [vmem:[#allocation8 + $0x80] sm:$0xff] %v1450
    %1515 = vst [vmem:[#allocation8 + $0x88] sm:$0xff] %v1451
    %1516 = vst [vmem:[#allocation8 + $0x90] sm:$0xff] %v1452
    %1517 = vst [vmem:[#allocation8 + $0x98] sm:$0xff] %v1453
    %1518 = vst [vmem:[#allocation8 + $0xa0] sm:$0xff] %v1454
    %1519 = vst [vmem:[#allocation8 + $0xa8] sm:$0xff] %v1455
    %1520 = vst [vmem:[#allocation8 + $0xb0] sm:$0xff] %v1456
    %1521 = vst [vmem:[#allocation8 + $0xb8] sm:$0xff] %v1457
    %1522 = vst [vmem:[#allocation8 + $0xc0] sm:$0xff] %v1458
    %1523 = vst [vmem:[#allocation8 + $0xc8] sm:$0xff] %v1459
    %1524 = vst [vmem:[#allocation8 + $0xd0] sm:$0xff] %v1460
    %1525 = vst [vmem:[#allocation8 + $0xd8] sm:$0xff] %v1461
    %1526 = vst [vmem:[#allocation8 + $0xe0] sm:$0xff] %v1462
    %1527 = vst [vmem:[#allocation8 + $0xe8] sm:$0xff] %v1463
    %1528 = vst [vmem:[#allocation8 + $0xf0] sm:$0xff] %v1464
    %1529 = vst [vmem:[#allocation8 + $0xf8] sm:$0xff] %v1465
    %1530 = vst [vmem:[#allocation8 + $0x100] sm:$0xff] %v1466
    %1531 = vst [vmem:[#allocation8 + $0x108] sm:$0xff] %v1467
    %1532 = vst [vmem:[#allocation8 + $0x110] sm:$0xff] %v1468
    %1533 = vst [vmem:[#allocation8 + $0x118] sm:$0xff] %v1469
    %1534 = vst [vmem:[#allocation8 + $0x120] sm:$0xff] %v1470
    %1535 = vst [vmem:[#allocation8 + $0x128] sm:$0xff] %v1471
    %1536 = vst [vmem:[#allocation8 + $0x130] sm:$0xff] %v1472
    %1537 = vst [vmem:[#allocation8 + $0x138] sm:$0xff] %v1473
    %1538 = vst [vmem:[#allocation8 + $0x140] sm:$0xff] %v1474
    %1539 = vst [vmem:[#allocation8 + $0x148] sm:$0xff] %v1475
    %1540 = vst [vmem:[#allocation8 + $0x150] sm:$0xff] %v1476
    %1541 = vst [vmem:[#allocation8 + $0x158] sm:$0xff] %v1477
    %1542 = vst [vmem:[#allocation8 + $0x160] sm:$0xff] %v1478
    %1543 = vst [vmem:[#allocation8 + $0x168] sm:$0xff] %v1479
    %1544 = vst [vmem:[#allocation8 + $0x170] sm:$0xff] %v1480
    %1545 = vst [vmem:[#allocation8 + $0x178] sm:$0xff] %v1481
    %1546 = vst [vmem:[#allocation8 + $0x180] sm:$0xff] %v1482
    %1547 = vst [vmem:[#allocation8 + $0x188] sm:$0xff] %v1483
    %1548 = vst [vmem:[#allocation8 + $0x190] sm:$0xff] %v1484
    %1549 = vst [vmem:[#allocation8 + $0x198] sm:$0xff] %v1485
    %1550 = vst [vmem:[#allocation8 + $0x1a0] sm:$0xff] %v1486
    %1551 = vst [vmem:[#allocation8 + $0x1a8] sm:$0xff] %v1487
    %1552 = vst [vmem:[#allocation8 + $0x1b0] sm:$0xff] %v1488
    %1553 = vst [vmem:[#allocation8 + $0x1b8] sm:$0xff] %v1489
    %1554 = vst [vmem:[#allocation8 + $0x1c0] sm:$0xff] %v1490
    %1555 = vst [vmem:[#allocation8 + $0x1c8] sm:$0xff] %v1491
    %1556 = vst [vmem:[#allocation8 + $0x1d0] sm:$0xff] %v1492
    %1557 = vst [vmem:[#allocation8 + $0x1d8] sm:$0xff] %v1493
    %1558 = vst [vmem:[#allocation8 + $0x1e0] sm:$0xff] %v1494
    %1559 = vst [vmem:[#allocation8 + $0x1e8] sm:$0xff] %v1495
    %1560 = vst [vmem:[#allocation8 + $0x1f0] sm:$0xff] %v1496
    %1561 = vst [vmem:[#allocation8 + $0x1f8] sm:$0xff] %v1497
    %v1562 = vld [vmem:[%s7] sm:$0xff]
    %1563 = vmatprep.subr.mxu0 %v1113
    %1564 = vmatpush1.msra.mxu0 %v1112
    %1565 = vmatprep.subr.mxu0 %v1115
    %1566 = vmatpush1.msra.mxu0 %v1114
    %1567 = vmatprep.subr.mxu0 %v1117
    %1568 = vmatpush1.msra.mxu0 %v1116
    %1569 = vmatprep.subr.mxu0 %v1119
    %1570 = vmatpush1.msra.mxu0 %v1118
    %1571 = vmatprep.subr.mxu0 %v1121
    %1572 = vmatpush1.msra.mxu0 %v1120
    %1573 = vmatprep.subr.mxu0 %v1123
    %1574 = vmatpush1.msra.mxu0 %v1122
    %1575 = vmatprep.subr.mxu0 %v1125
    %1576 = vmatpush1.msra.mxu0 %v1124
    %1577 = vmatprep.subr.mxu0 %v1127
    %1578 = vmatpush1.msra.mxu0 %v1126
    %1579 = vmatprep.subr.mxu0 %v1129
    %1580 = vmatpush1.msra.mxu0 %v1128
    %1581 = vmatprep.subr.mxu0 %v1131
    %1582 = vmatpush1.msra.mxu0 %v1130
    %1583 = vmatprep.subr.mxu0 %v1133
    %1584 = vmatpush1.msra.mxu0 %v1132
    %1585 = vmatprep.subr.mxu0 %v1135
    %1586 = vmatpush1.msra.mxu0 %v1134
    %1587 = vmatprep.subr.mxu0 %v1137
    %1588 = vmatpush1.msra.mxu0 %v1136
    %1589 = vmatprep.subr.mxu0 %v1139
    %1590 = vmatpush1.msra.mxu0 %v1138
    %1591 = vmatprep.subr.mxu0 %v1141
    %1592 = vmatpush1.msra.mxu0 %v1140
    %1593 = vmatprep.subr.mxu0 %v1143
    %1594 = vmatpush1.msra.mxu0 %v1142
    %1595 = vmatprep.subr.mxu0 0.0
    %1596 = vmatpush1.msra.mxu0 0.0
    %1597 = vmatprep.subr.mxu0 0.0
    %1598 = vmatpush1.msra.mxu0 0.0
    %1599 = vmatprep.subr.mxu0 0.0
    %1600 = vmatpush1.msra.mxu0 0.0
    %1601 = vmatprep.subr.mxu0 0.0
    %1602 = vmatpush1.msra.mxu0 0.0
    %1603 = vmatprep.subr.mxu0 0.0
    %1604 = vmatpush1.msra.mxu0 0.0
    %1605 = vmatprep.subr.mxu0 0.0
    %1606 = vmatpush1.msra.mxu0 0.0
    %1607 = vmatprep.subr.mxu0 0.0
    %1608 = vmatpush1.msra.mxu0 0.0
    %1609 = vmatprep.subr.mxu0 0.0
    %1610 = vmatpush1.msra.mxu0 0.0
    %1611 = vmatprep.subr.mxu0 0.0
    %1612 = vmatpush1.msra.mxu0 0.0
    %1613 = vmatprep.subr.mxu0 0.0
    %1614 = vmatpush1.msra.mxu0 0.0
    %1615 = vmatprep.subr.mxu0 0.0
    %1616 = vmatpush1.msra.mxu0 0.0
    %1617 = vmatprep.subr.mxu0 0.0
    %1618 = vmatpush1.msra.mxu0 0.0
    %1619 = vmatprep.subr.mxu0 0.0
    %1620 = vmatpush1.msra.mxu0 0.0
    %1621 = vmatprep.subr.mxu0 0.0
    %1622 = vmatpush1.msra.mxu0 0.0
    %1623 = vmatprep.subr.mxu0 0.0
    %1624 = vmatpush1.msra.mxu0 0.0
    %1625 = vmatprep.subr.mxu0 0.0
    %1626 = vmatpush1.msra.mxu0 0.0
    %1627 = vmatprep.mubr.f32.mxu0 0.0
    %1628 = vmatmul.mubr.f32.gmra.mrb[0].mxu0 %v1562
    %v1629 = vpop.f32.mrb[0].mxu0
    %v1630 = vadd.f32 0.0, %v1629
    %v1631 = vpop.f32.mrb[0].mxu0
    %v1632 = vadd.f32 0.0, %v1631
    %1633 = vdwg.mxu0
    %v1634 = vmul.f32 %v1433, %v1630
    %v1635 = vmul.f32 %v1433, %v1632
    %1636 = vst [vmem:[#allocation10] sm:$0xff] %v1634
    %1637 = vst [vmem:[#allocation10 + $0x8] sm:$0xff] %v1635
    // Predicated region
    $region42: #{tpu_custom_call.1} parent=1 // pred_check
      _
    $region43: #{tpu_custom_call.1} parent=1 // pred_check_branch
      %1639 = sbr.rel (0) target = $region45
    $region44: #{tpu_custom_call.1} parent=1 // pred_region
      %s1641 = ssub.s32 8192, 8192
      %1642 = vsyncadd [#allocation4], %s1641
      %s1643 = sshll.u32 [#allocation7], 4
      %s1644 = int_to_ptr.vmem [resolvable:$true] %s1643
      %1649 = dma.vmem_to_hbm [thread:$0]  %s1644, 8192, %s8, [#allocation4], 256, 256, 16
    $region45: #{tpu_custom_call.1} parent=1 // pred_fallthru
      _
    // Predicated region
    $region46: #{tpu_custom_call.1} parent=1 // pred_check
      _
    $region47: #{tpu_custom_call.1} parent=1 // pred_check_branch
      %1651 = sbr.rel (0) target = $region49
    $region48: #{tpu_custom_call.1} parent=1 // pred_region
      %s1653 = ssub.s32 8192, 8192
      %1654 = vsyncadd [#allocation9], %s1653
      %s1655 = sshll.u32 [#allocation8], 4
      %s1656 = int_to_ptr.vmem [resolvable:$true] %s1655
      %1661 = dma.vmem_to_hbm [thread:$0]  %s1656, 8192, %s9, [#allocation9], 256, 256, 16
    $region49: #{tpu_custom_call.1} parent=1 // pred_fallthru
      _
    // Predicated region
    $region50: #{tpu_custom_call.1} parent=1 // pred_check
      _
    $region51: #{tpu_custom_call.1} parent=1 // pred_check_branch
      %1663 = sbr.rel (0) target = $region53
    $region52: #{tpu_custom_call.1} parent=1 // pred_region
      %s1665 = ssub.s32 256, 256
      %1666 = vsyncadd [#allocation9], %s1665
      %s1668 = sshll.u32 [#allocation10], 4
      %s1669 = int_to_ptr.vmem [resolvable:$true] %s1668
      %1671 = dma.vmem_to_hbm [thread:$0]  %s1669, 256, %s10, [#allocation9]
    $region53: #{tpu_custom_call.1} parent=1 // pred_fallthru
      _
    // Predicated region
    $region54: #{tpu_custom_call.1} parent=1 // pred_check
      _
    $region55: #{tpu_custom_call.1} parent=1 // pred_check_branch
      %1673 = sbr.rel (0) target = $region57
    $region56: #{tpu_custom_call.1} parent=1 // pred_region
      %1674 = dma.done [#allocation4], 8192
    $region57: #{tpu_custom_call.1} parent=1 // pred_fallthru
      _
    // Predicated region
    $region58: #{tpu_custom_call.1} parent=1 // pred_check
      _
    $region59: #{tpu_custom_call.1} parent=1 // pred_check_branch
      %1676 = sbr.rel (0) target = $region61
    $region60: #{tpu_custom_call.1} parent=1 // pred_region
      %1677 = dma.done [#allocation9], 8192
    $region61: #{tpu_custom_call.1} parent=1 // pred_fallthru
      _
    // Predicated region
    $region62: #{tpu_custom_call.1} parent=1 // pred_check
      _
    $region63: #{tpu_custom_call.1} parent=1 // pred_check_branch
      %1679 = sbr.rel (0) target = $region65
    $region64: #{tpu_custom_call.1} parent=1 // pred_region
      %1680 = dma.done [#allocation9], 256
    $region65: #{tpu_custom_call.1} parent=1 // pred_fallthru
      _
    %1681 = vsyncpa [#allocation3], 1
    %1682 = vsyncpa [#allocation4], 1
    %1683 = vsyncpa [#allocation9], 1
    %1684 = vsyncpa [#allocation5], 1

</llo_original>
